<compile_context>
chip_gen: v7x
topology: tpu7x:2x2x1
jax: 0.10.0
libtpu: 0.0.40
codegen_flags: <defaults>
</compile_context>

<pallas_src>
import jax
import jax.numpy as jnp
import numpy as np
from jax.experimental import pallas as pl
from jax.experimental.pallas import tpu as pltpu

K1 = 7      # conv1 kernel size
K2 = 3      # conv2 kernel size
LANE = 128


def _conv_relu(x_f32, w_ref, b_ref):
    """'valid' Conv1d over a flattened [R, E] slab as K accumulated matmuls.

    out[r] = relu(b + sum_k x[(r+k) % R] @ W_k).  Rows whose taps wrap across a
    batch boundary are junk; the pooling matrix gives them zero weight.
    """
    r, e_in = x_f32.shape
    e_out = w_ref.shape[1]
    taps = w_ref.shape[0] // e_in
    xb = x_f32.astype(jnp.bfloat16)                      # cast once, before any shift
    acc = jnp.dot(xb, w_ref[pl.ds(0, e_in), :],          # tap 0, no shift
                  preferred_element_type=jnp.float32)
    for k in range(1, taps):
        zk = jnp.dot(xb, w_ref[pl.ds(k * e_in, e_in), :],  # 128-aligned static slice
                     preferred_element_type=jnp.float32)
        # out[r] += zk[(r+k) % R]  ==  roll rows up by k (XLU, free slot)
        acc = acc + pltpu.roll(zk, r - k, axis=0)
    return jnp.maximum(acc + b_ref[...], 0.0)            # [R, e_out] f32


def _mcap_kernel(x_ref, w1_ref, b1_ref, w2_ref, b2_ref, pool_ref,
                 wl_ref, bl_ref, wo_ref, bo_ref, out_ref):
    tb, l, e = x_ref.shape
    x = x_ref[...].reshape(tb * l, e)                    # contiguous collapse, free

    # ---- Conv1d #1 / #2 (valid) + ReLU --------------------------------------
    o1 = _conv_relu(x, w1_ref, b1_ref)                   # [R, E]; rows r%L>=L1 junk
    o2 = _conv_relu(o1, w2_ref, b2_ref)                  # [R, E]; rows r%L>=L2 junk

    # ---- mean over valid sequence rows as a matmul with a constant matrix ----
    pooled = jnp.dot(pool_ref[...], o2.astype(jnp.bfloat16),
                     preferred_element_type=jnp.float32)  # [tb, E]

    # ---- Linear(E,32)->Dropout(eval)=id->ReLU; hidden padded to 128 lanes ----
    h = jnp.dot(pooled.astype(jnp.bfloat16), wl_ref[...],
                preferred_element_type=jnp.float32) + bl_ref[...]
    h = jnp.maximum(h, 0.0)                              # [tb, 128] lane-dense

    # ---- output head Linear(32,out_dim), BatchNorm(eval) pre-folded ----------
    out_ref[...] = (jnp.dot(h.astype(jnp.bfloat16), wo_ref[...],
                            preferred_element_type=jnp.float32)
                    + bo_ref[...])                       # [tb, out_pad] lane-dense


def _plan_tiles(B, L, max_rows=1024):
    """Pick (tb, nsteps, B_pad).

    tb is a multiple of 8 (sublane rule for the (tb, out_pad) output block),
    tb*L stays near max_rows (VMEM headroom incl. v5e's 16 MiB scoped default),
    and nsteps >= 2 so both v7x TensorCores get work on the parallel axis.
    """
    # TODO(synk): for very long sequences (L*8 >> max_rows) tile over L as well.
    def r8up(v):
        return ((v + 7) // 8) * 8
    cdiv = lambda a, b: -(-a // b)
    tb_cap = max(8, (max_rows // L // 8) * 8)        # rows per step <= max_rows
    tb_half = r8up(max(1, cdiv(B, 2)))               # ~half the batch, rounded to 8
    tb = min(tb_cap, tb_half)
    nsteps = max(2, cdiv(B, tb))
    return tb, nsteps, nsteps * tb


def multiple_conv_avg_pool(x_ncl, params):
    """x_ncl: [B, E, L] float32 (PyTorch NCL layout).  Returns [B, out_dim]."""
    (w1, b1, w2, b2, wl, bl, gamma, beta, rmean, rvar, wo, bo) = params
    B, E, L = x_ncl.shape
    out_dim = wo.shape[0]
    hid = wl.shape[0]
    eps = 1e-5
    L1 = L - (K1 - 1)
    L2 = L1 - (K2 - 1)
    assert L2 >= 1, "sequence too short for the two valid convolutions"
    assert hid <= LANE, "hidden dim is padded to one lane width"

    tb, nsteps, b_pad = _plan_tiles(B, L)
    rows = tb * L
    hid_pad = LANE
    out_pad = max(LANE, pl.cdiv(out_dim, LANE) * LANE)

    # ---- plain-JAX glue (one-time): layout, tap stacking, BN folding ---------
    # TODO(synk): for large B, fuse this NCL->NLE transpose into the producer of
    # x (it is one full extra HBM read+write of x).
    x_nle = jnp.transpose(x_ncl, (0, 2, 1)).astype(jnp.float32)     # [B, L, E]
    if b_pad != B:
        x_nle = jnp.pad(x_nle, ((0, b_pad - B), (0, 0), (0, 0)))

    # Conv weights stacked tap-major: rows [k*E:(k+1)*E] of w?s == W[:, :, k].T
    w1s = jnp.transpose(w1, (2, 1, 0)).reshape(K1 * E, E).astype(jnp.bfloat16)
    w2s = jnp.transpose(w2, (2, 1, 0)).reshape(K2 * E, E).astype(jnp.bfloat16)

    # Linear(E, hid), hidden padded to 128 lanes.
    wl_p = jnp.zeros((E, hid_pad), jnp.bfloat16).at[:, :hid].set(
        wl.T.astype(jnp.bfloat16))
    bl_p = jnp.zeros((1, hid_pad), jnp.float32).at[:, :hid].set(bl[None, :])

    # BatchNorm1d(eval) folded into the output Linear.
    bn_scale = gamma / jnp.sqrt(rvar + eps)                       # [hid]
    bn_shift = beta - rmean * bn_scale                            # [hid]
    wo_eff = wo.T * bn_scale[:, None]                             # [hid, out_dim]
    bo_eff = bn_shift @ wo.T + bo                                 # [out_dim]
    wo_p = jnp.zeros((hid_pad, out_pad), jnp.bfloat16).at[:hid, :out_dim].set(
        wo_eff.astype(jnp.bfloat16))
    bo_p = jnp.zeros((1, out_pad), jnp.float32).at[:, :out_dim].set(
        bo_eff[None, :])

    # Pooling matrix: mean over the L2 valid conv2 rows of each batch element;
    # junk wrap rows (and padded batch elements' rows) get zero weight.
    pool_np = np.zeros((tb, rows), np.float32)
    for bb in range(tb):
        pool_np[bb, bb * L: bb * L + L2] = 1.0 / L2
    pool = jnp.asarray(pool_np).astype(jnp.bfloat16)

    grid_spec = pltpu.PrefetchScalarGridSpec(
        num_scalar_prefetch=0,
        grid=(nsteps,),
        in_specs=[
            pl.BlockSpec((tb, L, E), lambda i: (i, 0, 0)),        # x tile [tb,L,E]
            pl.BlockSpec((K1 * E, E), lambda i: (0, 0)),          # conv1 stacked w
            pl.BlockSpec((1, E), lambda i: (0, 0)),               # conv1 bias
            pl.BlockSpec((K2 * E, E), lambda i: (0, 0)),          # conv2 stacked w
            pl.BlockSpec((1, E), lambda i: (0, 0)),               # conv2 bias
            pl.BlockSpec((tb, rows), lambda i: (0, 0)),           # pooling matrix
            pl.BlockSpec((E, hid_pad), lambda i: (0, 0)),         # linear1 w (padded)
            pl.BlockSpec((1, hid_pad), lambda i: (0, 0)),         # linear1 b (padded)
            pl.BlockSpec((hid_pad, out_pad), lambda i: (0, 0)),   # head w (BN folded)
            pl.BlockSpec((1, out_pad), lambda i: (0, 0)),         # head b (BN folded)
        ],
        out_specs=pl.BlockSpec((tb, out_pad), lambda i: (i, 0)),
    )

    out = pl.pallas_call(
        _mcap_kernel,
        out_shape=jax.ShapeDtypeStruct((b_pad, out_pad), jnp.float32),
        grid_spec=grid_spec,
        compiler_params=pltpu.CompilerParams(
            dimension_semantics=("parallel",),
            vmem_limit_bytes=32 * 1024 * 1024),
    )(x_nle, w1s, b1.reshape(1, E).astype(jnp.float32),
      w2s, b2.reshape(1, E).astype(jnp.float32),
      pool, wl_p, bl_p, wo_p, bo_p)

    return out[:B, :out_dim]


def _reference(x_ncl, params):
    """Pure-JAX reference of the PyTorch forward (eval mode)."""
    (w1, b1, w2, b2, wl, bl, gamma, beta, rmean, rvar, wo, bo) = params
    dn = ("NCH", "OIH", "NCH")
    hp = jax.lax.Precision.HIGHEST
    o = jax.lax.conv_general_dilated(x_ncl, w1, (1,), "VALID",
                                     dimension_numbers=dn, precision=hp)
    o = jnp.maximum(o + b1[None, :, None], 0.0)
    o = jax.lax.conv_general_dilated(o, w2, (1,), "VALID",
                                     dimension_numbers=dn, precision=hp)
    o = jnp.maximum(o + b2[None, :, None], 0.0)
    o = jnp.mean(o, axis=-1)                                   # [B, E]
    h = jnp.maximum(o @ wl.T + bl, 0.0)                        # dropout = identity
    h = (h - rmean) / jnp.sqrt(rvar + 1e-5) * gamma + beta     # BN eval
    return h @ wo.T + bo


def _init_params(key, E, hid, out_dim):
    """Deterministic PyTorch-style uniform init (shapes match the module)."""
    ks = jax.random.split(key, 8)

    def u(k, shape, fan_in):
        bound = 1.0 / np.sqrt(fan_in)
        return jax.random.uniform(k, shape, jnp.float32, -bound, bound)

    w1 = u(ks[0], (E, E, K1), E * K1)
    b1 = u(ks[1], (E,), E * K1)
    w2 = u(ks[2], (E, E, K2), E * K2)
    b2 = u(ks[3], (E,), E * K2)
    wl = u(ks[4], (hid, E), E)
    bl = u(ks[5], (hid,), E)
    gamma = jnp.ones((hid,), jnp.float32)
    beta = jnp.zeros((hid,), jnp.float32)
    rmean = jnp.zeros((hid,), jnp.float32)
    rvar = jnp.ones((hid,), jnp.float32)
    wo = u(ks[6], (out_dim, hid), hid)
    bo = u(ks[7], (out_dim,), hid)
    return (w1, b1, w2, b2, wl, bl, gamma, beta, rmean, rvar, wo, bo)


if __name__ == "__main__":
    # Small shapes consistent with the module: batch=2, embeddings_dim=128,
    # seq_len=16, hidden=32, output_dim=12, kernel_size=7 (default).
    B, E, L, HID, OUT = 2, 128, 16, 32, 12

    key = jax.random.PRNGKey(0)
    kx, kp = jax.random.split(key)
    x = jax.random.normal(kx, (B, E, L), dtype=jnp.float32)   # PyTorch NCL layout
    params = _init_params(kp, E, HID, OUT)

    # mask / sequence_lengths / frequencies are unused by the forward pass.
    out = jax.block_until_ready(multiple_conv_avg_pool(x, params))
    ref = jax.block_until_ready(_reference(x, params))

    np.testing.assert_allclose(np.asarray(out), np.asarray(ref),
                               rtol=2e-2, atol=2e-2)
    assert out.shape == (B, OUT)
    print("KERNEL_OK")
</pallas_src>

<mosaic_0001>
module attributes {stable_mosaic.version = 11 : i64} {
  func.func @_mcap_kernel(%arg0: i32, %arg1: memref<8x16x128xf32, #tpu.memory_space<vmem>>, %arg2: memref<896x128xbf16, #tpu.memory_space<vmem>>, %arg3: memref<1x128xf32, #tpu.memory_space<vmem>>, %arg4: memref<384x128xbf16, #tpu.memory_space<vmem>>, %arg5: memref<1x128xf32, #tpu.memory_space<vmem>>, %arg6: memref<8x128xbf16, #tpu.memory_space<vmem>>, %arg7: memref<128x128xbf16, #tpu.memory_space<vmem>>, %arg8: memref<1x128xf32, #tpu.memory_space<vmem>>, %arg9: memref<128x128xbf16, #tpu.memory_space<vmem>>, %arg10: memref<1x128xf32, #tpu.memory_space<vmem>>, %arg11: memref<8x128xf32, #tpu.memory_space<vmem>>) attributes {dimension_semantics = [#tpu.dimension_semantics<parallel>], iteration_bounds = array<i64: 2>, scalar_prefetch = 0 : i64, scratch_operands = 0 : i64, tpu.core_type = #tpu.core_type<tc>, window_params = [{transform_indices = @transform_0, window_bounds = array<i64: 8, 16, 128>}, {pipeline_mode = #tpu.pipeline_mode<synchronous>, transform_indices = @transform_1, window_bounds = array<i64: 896, 128>}, {pipeline_mode = #tpu.pipeline_mode<synchronous>, transform_indices = @transform_2, window_bounds = array<i64: 1, 128>}, {pipeline_mode = #tpu.pipeline_mode<synchronous>, transform_indices = @transform_3, window_bounds = array<i64: 384, 128>}, {pipeline_mode = #tpu.pipeline_mode<synchronous>, transform_indices = @transform_4, window_bounds = array<i64: 1, 128>}, {pipeline_mode = #tpu.pipeline_mode<synchronous>, transform_indices = @transform_5, window_bounds = array<i64: 8, 128>}, {pipeline_mode = #tpu.pipeline_mode<synchronous>, transform_indices = @transform_6, window_bounds = array<i64: 128, 128>}, {pipeline_mode = #tpu.pipeline_mode<synchronous>, transform_indices = @transform_7, window_bounds = array<i64: 1, 128>}, {pipeline_mode = #tpu.pipeline_mode<synchronous>, transform_indices = @transform_8, window_bounds = array<i64: 128, 128>}, {pipeline_mode = #tpu.pipeline_mode<synchronous>, transform_indices = @transform_9, window_bounds = array<i64: 1, 128>}, {transform_indices = @transform_10, window_bounds = array<i64: 8, 128>}]} {
    %c0 = arith.constant 0 : index
    %c0_0 = arith.constant 0 : index
    %c0_1 = arith.constant 0 : index
    %0 = vector.load %arg1[%c0, %c0_0, %c0_1] : memref<8x16x128xf32, #tpu.memory_space<vmem>>, vector<8x16x128xf32>
    %1 = vector.shape_cast %0 : vector<8x16x128xf32> to vector<128x128xf32>
    %2 = arith.truncf %1 : vector<128x128xf32> to vector<128x128xbf16>
    %c0_2 = arith.constant 0 : index
    %c0_3 = arith.constant 0 : index
    %3 = vector.load %arg2[%c0_2, %c0_3] : memref<896x128xbf16, #tpu.memory_space<vmem>>, vector<128x128xbf16>
    %cst = arith.constant dense<0.000000e+00> : vector<128x128xf32>
    %4 = tpu.matmul %2, %3, %cst {dimension_numbers = #tpu.dot_dimension_numbers<[1], [0], [0], [1], [0, 0, 1, 1], [], []>} : vector<128x128xbf16>, vector<128x128xbf16>, vector<128x128xf32> -> vector<128x128xf32>
    %c128 = arith.constant 128 : index
    %c0_4 = arith.constant 0 : index
    %5 = vector.load %arg2[%c128, %c0_4] : memref<896x128xbf16, #tpu.memory_space<vmem>>, vector<128x128xbf16>
    %cst_5 = arith.constant dense<0.000000e+00> : vector<128x128xf32>
    %6 = tpu.matmul %2, %5, %cst_5 {dimension_numbers = #tpu.dot_dimension_numbers<[1], [0], [0], [1], [0, 0, 1, 1], [], []>} : vector<128x128xbf16>, vector<128x128xbf16>, vector<128x128xf32> -> vector<128x128xf32>
    %c127_i32 = arith.constant 127 : i32
    %7 = tpu.dynamic_rotate %6 by %c127_i32 dim 0 : vector<128x128xf32>, i32 -> vector<128x128xf32>
    %8 = arith.addf %4, %7 : vector<128x128xf32>
    %c256 = arith.constant 256 : index
    %c0_6 = arith.constant 0 : index
    %9 = vector.load %arg2[%c256, %c0_6] : memref<896x128xbf16, #tpu.memory_space<vmem>>, vector<128x128xbf16>
    %cst_7 = arith.constant dense<0.000000e+00> : vector<128x128xf32>
    %10 = tpu.matmul %2, %9, %cst_7 {dimension_numbers = #tpu.dot_dimension_numbers<[1], [0], [0], [1], [0, 0, 1, 1], [], []>} : vector<128x128xbf16>, vector<128x128xbf16>, vector<128x128xf32> -> vector<128x128xf32>
    %c126_i32 = arith.constant 126 : i32
    %11 = tpu.dynamic_rotate %10 by %c126_i32 dim 0 : vector<128x128xf32>, i32 -> vector<128x128xf32>
    %12 = arith.addf %8, %11 : vector<128x128xf32>
    %c384 = arith.constant 384 : index
    %c0_8 = arith.constant 0 : index
    %13 = vector.load %arg2[%c384, %c0_8] : memref<896x128xbf16, #tpu.memory_space<vmem>>, vector<128x128xbf16>
    %cst_9 = arith.constant dense<0.000000e+00> : vector<128x128xf32>
    %14 = tpu.matmul %2, %13, %cst_9 {dimension_numbers = #tpu.dot_dimension_numbers<[1], [0], [0], [1], [0, 0, 1, 1], [], []>} : vector<128x128xbf16>, vector<128x128xbf16>, vector<128x128xf32> -> vector<128x128xf32>
    %c125_i32 = arith.constant 125 : i32
    %15 = tpu.dynamic_rotate %14 by %c125_i32 dim 0 : vector<128x128xf32>, i32 -> vector<128x128xf32>
    %16 = arith.addf %12, %15 : vector<128x128xf32>
    %c512 = arith.constant 512 : index
    %c0_10 = arith.constant 0 : index
    %17 = vector.load %arg2[%c512, %c0_10] : memref<896x128xbf16, #tpu.memory_space<vmem>>, vector<128x128xbf16>
    %cst_11 = arith.constant dense<0.000000e+00> : vector<128x128xf32>
    %18 = tpu.matmul %2, %17, %cst_11 {dimension_numbers = #tpu.dot_dimension_numbers<[1], [0], [0], [1], [0, 0, 1, 1], [], []>} : vector<128x128xbf16>, vector<128x128xbf16>, vector<128x128xf32> -> vector<128x128xf32>
    %c124_i32 = arith.constant 124 : i32
    %19 = tpu.dynamic_rotate %18 by %c124_i32 dim 0 : vector<128x128xf32>, i32 -> vector<128x128xf32>
    %20 = arith.addf %16, %19 : vector<128x128xf32>
    %c640 = arith.constant 640 : index
    %c0_12 = arith.constant 0 : index
    %21 = vector.load %arg2[%c640, %c0_12] : memref<896x128xbf16, #tpu.memory_space<vmem>>, vector<128x128xbf16>
    %cst_13 = arith.constant dense<0.000000e+00> : vector<128x128xf32>
    %22 = tpu.matmul %2, %21, %cst_13 {dimension_numbers = #tpu.dot_dimension_numbers<[1], [0], [0], [1], [0, 0, 1, 1], [], []>} : vector<128x128xbf16>, vector<128x128xbf16>, vector<128x128xf32> -> vector<128x128xf32>
    %c123_i32 = arith.constant 123 : i32
    %23 = tpu.dynamic_rotate %22 by %c123_i32 dim 0 : vector<128x128xf32>, i32 -> vector<128x128xf32>
    %24 = arith.addf %20, %23 : vector<128x128xf32>
    %c768 = arith.constant 768 : index
    %c0_14 = arith.constant 0 : index
    %25 = vector.load %arg2[%c768, %c0_14] : memref<896x128xbf16, #tpu.memory_space<vmem>>, vector<128x128xbf16>
    %cst_15 = arith.constant dense<0.000000e+00> : vector<128x128xf32>
    %26 = tpu.matmul %2, %25, %cst_15 {dimension_numbers = #tpu.dot_dimension_numbers<[1], [0], [0], [1], [0, 0, 1, 1], [], []>} : vector<128x128xbf16>, vector<128x128xbf16>, vector<128x128xf32> -> vector<128x128xf32>
    %c122_i32 = arith.constant 122 : i32
    %27 = tpu.dynamic_rotate %26 by %c122_i32 dim 0 : vector<128x128xf32>, i32 -> vector<128x128xf32>
    %28 = arith.addf %24, %27 : vector<128x128xf32>
    %c0_16 = arith.constant 0 : index
    %c0_17 = arith.constant 0 : index
    %29 = vector.load %arg3[%c0_16, %c0_17] : memref<1x128xf32, #tpu.memory_space<vmem>>, vector<1x128xf32>
    %30 = vector.broadcast %29 : vector<1x128xf32> to vector<128x128xf32>
    %31 = arith.addf %28, %30 : vector<128x128xf32>
    %cst_18 = arith.constant 0.000000e+00 : f32
    %32 = vector.broadcast %cst_18 : f32 to vector<128x128xf32>
    %33 = arith.maximumf %31, %32 : vector<128x128xf32>
    %34 = arith.truncf %33 : vector<128x128xf32> to vector<128x128xbf16>
    %c0_19 = arith.constant 0 : index
    %c0_20 = arith.constant 0 : index
    %35 = vector.load %arg4[%c0_19, %c0_20] : memref<384x128xbf16, #tpu.memory_space<vmem>>, vector<128x128xbf16>
    %cst_21 = arith.constant dense<0.000000e+00> : vector<128x128xf32>
    %36 = tpu.matmul %34, %35, %cst_21 {dimension_numbers = #tpu.dot_dimension_numbers<[1], [0], [0], [1], [0, 0, 1, 1], [], []>} : vector<128x128xbf16>, vector<128x128xbf16>, vector<128x128xf32> -> vector<128x128xf32>
    %c128_22 = arith.constant 128 : index
    %c0_23 = arith.constant 0 : index
    %37 = vector.load %arg4[%c128_22, %c0_23] : memref<384x128xbf16, #tpu.memory_space<vmem>>, vector<128x128xbf16>
    %cst_24 = arith.constant dense<0.000000e+00> : vector<128x128xf32>
    %38 = tpu.matmul %34, %37, %cst_24 {dimension_numbers = #tpu.dot_dimension_numbers<[1], [0], [0], [1], [0, 0, 1, 1], [], []>} : vector<128x128xbf16>, vector<128x128xbf16>, vector<128x128xf32> -> vector<128x128xf32>
    %c127_i32_25 = arith.constant 127 : i32
    %39 = tpu.dynamic_rotate %38 by %c127_i32_25 dim 0 : vector<128x128xf32>, i32 -> vector<128x128xf32>
    %40 = arith.addf %36, %39 : vector<128x128xf32>
    %c256_26 = arith.constant 256 : index
    %c0_27 = arith.constant 0 : index
    %41 = vector.load %arg4[%c256_26, %c0_27] : memref<384x128xbf16, #tpu.memory_space<vmem>>, vector<128x128xbf16>
    %cst_28 = arith.constant dense<0.000000e+00> : vector<128x128xf32>
    %42 = tpu.matmul %34, %41, %cst_28 {dimension_numbers = #tpu.dot_dimension_numbers<[1], [0], [0], [1], [0, 0, 1, 1], [], []>} : vector<128x128xbf16>, vector<128x128xbf16>, vector<128x128xf32> -> vector<128x128xf32>
    %c126_i32_29 = arith.constant 126 : i32
    %43 = tpu.dynamic_rotate %42 by %c126_i32_29 dim 0 : vector<128x128xf32>, i32 -> vector<128x128xf32>
    %44 = arith.addf %40, %43 : vector<128x128xf32>
    %c0_30 = arith.constant 0 : index
    %c0_31 = arith.constant 0 : index
    %45 = vector.load %arg5[%c0_30, %c0_31] : memref<1x128xf32, #tpu.memory_space<vmem>>, vector<1x128xf32>
    %46 = vector.broadcast %45 : vector<1x128xf32> to vector<128x128xf32>
    %47 = arith.addf %44, %46 : vector<128x128xf32>
    %cst_32 = arith.constant 0.000000e+00 : f32
    %48 = vector.broadcast %cst_32 : f32 to vector<128x128xf32>
    %49 = arith.maximumf %47, %48 : vector<128x128xf32>
    %c0_33 = arith.constant 0 : index
    %c0_34 = arith.constant 0 : index
    %50 = vector.load %arg6[%c0_33, %c0_34] : memref<8x128xbf16, #tpu.memory_space<vmem>>, vector<8x128xbf16>
    %51 = arith.truncf %49 : vector<128x128xf32> to vector<128x128xbf16>
    %cst_35 = arith.constant dense<0.000000e+00> : vector<8x128xf32>
    %52 = tpu.matmul %50, %51, %cst_35 {dimension_numbers = #tpu.dot_dimension_numbers<[1], [0], [0], [1], [0, 0, 1, 1], [], []>} : vector<8x128xbf16>, vector<128x128xbf16>, vector<8x128xf32> -> vector<8x128xf32>
    %53 = arith.truncf %52 : vector<8x128xf32> to vector<8x128xbf16>
    %c0_36 = arith.constant 0 : index
    %c0_37 = arith.constant 0 : index
    %54 = vector.load %arg7[%c0_36, %c0_37] : memref<128x128xbf16, #tpu.memory_space<vmem>>, vector<128x128xbf16>
    %cst_38 = arith.constant dense<0.000000e+00> : vector<8x128xf32>
    %55 = tpu.matmul %53, %54, %cst_38 {dimension_numbers = #tpu.dot_dimension_numbers<[1], [0], [0], [1], [0, 0, 1, 1], [], []>} : vector<8x128xbf16>, vector<128x128xbf16>, vector<8x128xf32> -> vector<8x128xf32>
    %c0_39 = arith.constant 0 : index
    %c0_40 = arith.constant 0 : index
    %56 = vector.load %arg8[%c0_39, %c0_40] : memref<1x128xf32, #tpu.memory_space<vmem>>, vector<1x128xf32>
    %57 = vector.broadcast %56 : vector<1x128xf32> to vector<8x128xf32>
    %58 = arith.addf %55, %57 : vector<8x128xf32>
    %cst_41 = arith.constant 0.000000e+00 : f32
    %59 = vector.broadcast %cst_41 : f32 to vector<8x128xf32>
    %60 = arith.maximumf %58, %59 : vector<8x128xf32>
    %61 = arith.truncf %60 : vector<8x128xf32> to vector<8x128xbf16>
    %c0_42 = arith.constant 0 : index
    %c0_43 = arith.constant 0 : index
    %62 = vector.load %arg9[%c0_42, %c0_43] : memref<128x128xbf16, #tpu.memory_space<vmem>>, vector<128x128xbf16>
    %cst_44 = arith.constant dense<0.000000e+00> : vector<8x128xf32>
    %63 = tpu.matmul %61, %62, %cst_44 {dimension_numbers = #tpu.dot_dimension_numbers<[1], [0], [0], [1], [0, 0, 1, 1], [], []>} : vector<8x128xbf16>, vector<128x128xbf16>, vector<8x128xf32> -> vector<8x128xf32>
    %c0_45 = arith.constant 0 : index
    %c0_46 = arith.constant 0 : index
    %64 = vector.load %arg10[%c0_45, %c0_46] : memref<1x128xf32, #tpu.memory_space<vmem>>, vector<1x128xf32>
    %65 = vector.broadcast %64 : vector<1x128xf32> to vector<8x128xf32>
    %66 = arith.addf %63, %65 : vector<8x128xf32>
    %c0_47 = arith.constant 0 : index
    %c0_48 = arith.constant 0 : index
    %67 = vector.load %arg11[%c0_47, %c0_48] : memref<8x128xf32, #tpu.memory_space<vmem>>, vector<8x128xf32>
    tpu.vector_store %arg11[%c0_47, %c0_48], %66 {strides = array<i32>} : memref<8x128xf32, #tpu.memory_space<vmem>>, vector<8x128xf32>,
    return
  }
  func.func @transform_0(%arg0: i32) -> (i32, i32, i32) {
    %c0_i32 = arith.constant 0 : i32
    %c0_i32_0 = arith.constant 0 : i32
    %c0_i32_1 = arith.constant 0 : i32
    return %arg0, %c0_i32, %c0_i32_0 : i32, i32, i32
  }
  func.func @transform_1(%arg0: i32) -> (i32, i32) {
    %c0_i32 = arith.constant 0 : i32
    %c0_i32_0 = arith.constant 0 : i32
    %c0_i32_1 = arith.constant 0 : i32
    return %c0_i32, %c0_i32_0 : i32, i32
  }
  func.func @transform_2(%arg0: i32) -> (i32, i32) {
    %c0_i32 = arith.constant 0 : i32
    %c0_i32_0 = arith.constant 0 : i32
    %c0_i32_1 = arith.constant 0 : i32
    return %c0_i32, %c0_i32_0 : i32, i32
  }
  func.func @transform_3(%arg0: i32) -> (i32, i32) {
    %c0_i32 = arith.constant 0 : i32
    %c0_i32_0 = arith.constant 0 : i32
    %c0_i32_1 = arith.constant 0 : i32
    return %c0_i32, %c0_i32_0 : i32, i32
  }
  func.func @transform_4(%arg0: i32) -> (i32, i32) {
    %c0_i32 = arith.constant 0 : i32
    %c0_i32_0 = arith.constant 0 : i32
    %c0_i32_1 = arith.constant 0 : i32
    return %c0_i32, %c0_i32_0 : i32, i32
  }
  func.func @transform_5(%arg0: i32) -> (i32, i32) {
    %c0_i32 = arith.constant 0 : i32
    %c0_i32_0 = arith.constant 0 : i32
    %c0_i32_1 = arith.constant 0 : i32
    return %c0_i32, %c0_i32_0 : i32, i32
  }
  func.func @transform_6(%arg0: i32) -> (i32, i32) {
    %c0_i32 = arith.constant 0 : i32
    %c0_i32_0 = arith.constant 0 : i32
    %c0_i32_1 = arith.constant 0 : i32
    return %c0_i32, %c0_i32_0 : i32, i32
  }
  func.func @transform_7(%arg0: i32) -> (i32, i32) {
    %c0_i32 = arith.constant 0 : i32
    %c0_i32_0 = arith.constant 0 : i32
    %c0_i32_1 = arith.constant 0 : i32
    return %c0_i32, %c0_i32_0 : i32, i32
  }
  func.func @transform_8(%arg0: i32) -> (i32, i32) {
    %c0_i32 = arith.constant 0 : i32
    %c0_i32_0 = arith.constant 0 : i32
    %c0_i32_1 = arith.constant 0 : i32
    return %c0_i32, %c0_i32_0 : i32, i32
  }
  func.func @transform_9(%arg0: i32) -> (i32, i32) {
    %c0_i32 = arith.constant 0 : i32
    %c0_i32_0 = arith.constant 0 : i32
    %c0_i32_1 = arith.constant 0 : i32
    return %c0_i32, %c0_i32_0 : i32, i32
  }
  func.func @transform_10(%arg0: i32) -> (i32, i32) {
    %c0_i32 = arith.constant 0 : i32
    %c0_i32_0 = arith.constant 0 : i32
    return %arg0, %c0_i32 : i32, i32
  }
}

</mosaic_0001>

<llo_original>
// kernel: tpu_custom_call.1
$region0: #{tpu_custom_call.1}
  #allocation0 [shape = 'u32[]', space=smem, size = 0x4, offset = 0x4, fixed_abs, tag = 'smem constant byte address 0x4 - core index']
  #allocation1 [shape = 'u32[144,128]{1,0:T(1,128)}', space=vmem, size = 0x12000, scoped, tag = 'internal scratch']
  %s0 = inlined_call_operand.hbm [shape: f32[16,16,128], index: 0, kind: input, shape index: {}]
  %s1 = inlined_call_operand.hbm [shape: bf16[896,128], index: 1, kind: input, shape index: {}]
  %s2 = inlined_call_operand.vmem [shape: f32[1,128], index: 2, kind: input, shape index: {}]
  %s3 = inlined_call_operand.hbm [shape: bf16[384,128], index: 3, kind: input, shape index: {}]
  %s4 = inlined_call_operand.vmem [shape: f32[1,128], index: 4, kind: input, shape index: {}]
  %s5 = inlined_call_operand.vmem [shape: bf16[8,128], index: 5, kind: input, shape index: {}]
  %s6 = inlined_call_operand.hbm [shape: bf16[128,128], index: 6, kind: input, shape index: {}]
  %s7 = inlined_call_operand.vmem [shape: f32[1,128], index: 7, kind: input, shape index: {}]
  %s8 = inlined_call_operand.hbm [shape: bf16[128,128], index: 8, kind: input, shape index: {}]
  %s9 = inlined_call_operand.vmem [shape: f32[1,128], index: 9, kind: input, shape index: {}]
  %s10 = inlined_call_operand.hbm [shape: f32[16,128], index: 10, kind: output, shape index: {}]
  %s11 = sld [smem:[#allocation0]]
  $region93: #{tpu_custom_call.1} parent=0
    _
  %s13 = ssub.s32 1, %s11
  %s14 = scalar_select 0, %s13, %s11
  $region1: #{tpu_custom_call.1} parent=0
    #allocation2 [shape = 'u8[131072]{0}', space=vmem, size = 0x20000, scoped, tag = 'input window, operand 0']
    #allocation3 [shape = 's32[2]{0}', space=sflag, size = 0x8, scoped, tag = 'scoped memory for tpu_custom_call.1']
    #allocation4 [shape = 's32[2]{0}', space=sflag, size = 0x8, scoped, tag = 'scoped memory for tpu_custom_call.1']
    #allocation5 [shape = 'u8[229376]{0}', space=vmem, size = 0x38000, scoped, tag = 'input window, operand 1, single buffered']
    #allocation6 [shape = 's32[1]{0}', space=sflag, size = 0x4, scoped, tag = 'scoped memory for tpu_custom_call.1']
    #allocation7 [shape = 'u8[98304]{0}', space=vmem, size = 0x18000, scoped, tag = 'input window, operand 3, single buffered']
    #allocation8 [shape = 'u8[32768]{0}', space=vmem, size = 0x8000, scoped, tag = 'input window, operand 6, single buffered']
    #allocation9 [shape = 's32[1]{0}', space=sflag, size = 0x4, scoped, tag = 'scoped memory for tpu_custom_call.1']
    #allocation10 [shape = 'u8[32768]{0}', space=vmem, size = 0x8000, scoped, tag = 'input window, operand 8, single buffered']
    #allocation11 [shape = 'u8[8192]{0}', space=vmem, size = 0x2000, scoped, tag = 'output window, operand 0']
    %15 = vsyncpa [#allocation3], 0
    %s16 = scalar_lea.sflag [#allocation3], 1
    %17 = vsyncpa %s16, 0
    %18 = vsyncpa [#allocation6], 0
    %19 = vsyncpa [#allocation9], 0
    %20 = vsyncpa [#allocation4], 0
    %s21 = scalar_lea.sflag [#allocation4], 1
    %22 = vsyncpa %s21, 0
    loop: start=0, step=1, limit=4
    $region2: #{tpu_custom_call.1} parent=1 // loop_pre_header
      _
    $region3: #{tpu_custom_call.1} parent=1 // loop_header
      %s24 = sphi 0, %s28
      %p25 = scmp.ge.s32.totalorder %s24, 4
      %s34 = sphi 0, %s36
      %s37 = sphi 0, %s34
      %s38 = sphi 0, %s37
      %s54 = sphi 0, %s38
      %s58 = sphi 0, %s58
      %s60 = sphi 0, %s58
      %s61 = sphi 0, %s60
      %s75 = sphi 0, %s61
      %s79 = sphi 0, %s79
      %s81 = sphi 0, %s79
      %s82 = sphi 0, %s81
      %s96 = sphi 0, %s82
      %s100 = sphi 0, %s100
      %s102 = sphi 0, %s100
      %s103 = sphi 0, %s102
      %s117 = sphi 0, %s103
      %s121 = sphi 0, %s121
      %s123 = sphi 0, %s121
      %s124 = sphi 0, %s123
      %s138 = sphi 0, %s124
      %s142 = sphi 0, %s142
      %s144 = sphi 0, %s142
      %s145 = sphi 0, %s144
      %s159 = sphi 0, %s145
      %s163 = sphi 0, %s163
      %s165 = sphi 0, %s163
      %s166 = sphi 0, %s165
      %s180 = sphi 0, %s166
      %s184 = sphi 0, %s184
      %s186 = sphi 0, %s184
      %s187 = sphi 0, %s186
      %s201 = sphi 0, %s187
      %s205 = sphi 0, %s205
      %s207 = sphi 0, %s205
      %s208 = sphi 0, %s207
      %s222 = sphi 0, %s208
      %s226 = sphi 0, %s226
      %s228 = sphi 0, %s226
      %s229 = sphi 0, %s228
      %s243 = sphi 0, %s229
      %s249 = sphi 0, %s251
      %s252 = sphi 0, %s249
      %s253 = sphi 0, %s252
      %s269 = sphi 0, %s253
    $region4: #{tpu_custom_call.1} parent=1 // loop_header_branch
      %27 = sbr.rel (%p25) target = $region8
    $region5: #{tpu_custom_call.1} parent=1 // loop_body
      %s29 = ssub.s32 %s24, 1
      %s30 = ssub.s32 %s24, 2
      %s31 = sadd.s32 %s24, 1
      %s32 = ssub.s32 %s24, %s31
      %p33 = scmp.eq.s32.totalorder %s32, 0
      %s35 = sadd.s32 %s34, 1
      %s36 = scalar_select %p33, %s34, %s35
      %p39 = pneg %p33
      %p40 = scmp.eq.s32.totalorder %s24, 1
      %p41 = por %p39, %p40
      %p42 = scmp.ne.s32.totalorder %s34, %s37
      %p43 = scmp.eq.s32.totalorder %s24, 0
      %p44 = por %p42, %p43
      %p45 = scmp.ne.s32.totalorder %s34, %s37
      %p46 = scmp.eq.s32.totalorder %s29, 1
      %p47 = por %p45, %p46
      %p48 = scmp.ne.s32.totalorder %s37, %s38
      %p49 = scmp.eq.s32.totalorder %s29, 0
      %p50 = por %p48, %p49
      %p51 = scmp.ne.s32.totalorder %s37, %s38
      %p52 = scmp.eq.s32.totalorder %s30, 1
      %p53 = por %p51, %p52
      %p55 = scmp.ne.s32.totalorder %s38, %s54
      %p56 = scmp.eq.s32.totalorder %s30, 0
      %p57 = por %p55, %p56
      %s59 = sadd.s32 %s58, 1
      %p62 = scmp.eq.s32.totalorder %s24, 1
      %p63 = scmp.ne.s32.totalorder %s58, %s60
      %p64 = scmp.eq.s32.totalorder %s24, 0
      %p65 = por %p63, %p64
      %p66 = scmp.ne.s32.totalorder %s58, %s60
      %p67 = scmp.eq.s32.totalorder %s29, 1
      %p68 = por %p66, %p67
      %p69 = scmp.ne.s32.totalorder %s60, %s61
      %p70 = scmp.eq.s32.totalorder %s29, 0
      %p71 = por %p69, %p70
      %p72 = scmp.ne.s32.totalorder %s60, %s61
      %p73 = scmp.eq.s32.totalorder %s30, 1
      %p74 = por %p72, %p73
      %p76 = scmp.ne.s32.totalorder %s61, %s75
      %p77 = scmp.eq.s32.totalorder %s30, 0
      %p78 = por %p76, %p77
      %s80 = sadd.s32 %s79, 1
      %p83 = scmp.eq.s32.totalorder %s24, 1
      %p84 = scmp.ne.s32.totalorder %s79, %s81
      %p85 = scmp.eq.s32.totalorder %s24, 0
      %p86 = por %p84, %p85
      %p87 = scmp.ne.s32.totalorder %s79, %s81
      %p88 = scmp.eq.s32.totalorder %s29, 1
      %p89 = por %p87, %p88
      %p90 = scmp.ne.s32.totalorder %s81, %s82
      %p91 = scmp.eq.s32.totalorder %s29, 0
      %p92 = por %p90, %p91
      %p93 = scmp.ne.s32.totalorder %s81, %s82
      %p94 = scmp.eq.s32.totalorder %s30, 1
      %p95 = por %p93, %p94
      %p97 = scmp.ne.s32.totalorder %s82, %s96
      %p98 = scmp.eq.s32.totalorder %s30, 0
      %p99 = por %p97, %p98
      %s101 = sadd.s32 %s100, 1
      %p104 = scmp.eq.s32.totalorder %s24, 1
      %p105 = scmp.ne.s32.totalorder %s100, %s102
      %p106 = scmp.eq.s32.totalorder %s24, 0
      %p107 = por %p105, %p106
      %p108 = scmp.ne.s32.totalorder %s100, %s102
      %p109 = scmp.eq.s32.totalorder %s29, 1
      %p110 = por %p108, %p109
      %p111 = scmp.ne.s32.totalorder %s102, %s103
      %p112 = scmp.eq.s32.totalorder %s29, 0
      %p113 = por %p111, %p112
      %p114 = scmp.ne.s32.totalorder %s102, %s103
      %p115 = scmp.eq.s32.totalorder %s30, 1
      %p116 = por %p114, %p115
      %p118 = scmp.ne.s32.totalorder %s103, %s117
      %p119 = scmp.eq.s32.totalorder %s30, 0
      %p120 = por %p118, %p119
      %s122 = sadd.s32 %s121, 1
      %p125 = scmp.eq.s32.totalorder %s24, 1
      %p126 = scmp.ne.s32.totalorder %s121, %s123
      %p127 = scmp.eq.s32.totalorder %s24, 0
      %p128 = por %p126, %p127
      %p129 = scmp.ne.s32.totalorder %s121, %s123
      %p130 = scmp.eq.s32.totalorder %s29, 1
      %p131 = por %p129, %p130
      %p132 = scmp.ne.s32.totalorder %s123, %s124
      %p133 = scmp.eq.s32.totalorder %s29, 0
      %p134 = por %p132, %p133
      %p135 = scmp.ne.s32.totalorder %s123, %s124
      %p136 = scmp.eq.s32.totalorder %s30, 1
      %p137 = por %p135, %p136
      %p139 = scmp.ne.s32.totalorder %s124, %s138
      %p140 = scmp.eq.s32.totalorder %s30, 0
      %p141 = por %p139, %p140
      %s143 = sadd.s32 %s142, 1
      %p146 = scmp.eq.s32.totalorder %s24, 1
      %p147 = scmp.ne.s32.totalorder %s142, %s144
      %p148 = scmp.eq.s32.totalorder %s24, 0
      %p149 = por %p147, %p148
      %p150 = scmp.ne.s32.totalorder %s142, %s144
      %p151 = scmp.eq.s32.totalorder %s29, 1
      %p152 = por %p150, %p151
      %p153 = scmp.ne.s32.totalorder %s144, %s145
      %p154 = scmp.eq.s32.totalorder %s29, 0
      %p155 = por %p153, %p154
      %p156 = scmp.ne.s32.totalorder %s144, %s145
      %p157 = scmp.eq.s32.totalorder %s30, 1
      %p158 = por %p156, %p157
      %p160 = scmp.ne.s32.totalorder %s145, %s159
      %p161 = scmp.eq.s32.totalorder %s30, 0
      %p162 = por %p160, %p161
      %s164 = sadd.s32 %s163, 1
      %p167 = scmp.eq.s32.totalorder %s24, 1
      %p168 = scmp.ne.s32.totalorder %s163, %s165
      %p169 = scmp.eq.s32.totalorder %s24, 0
      %p170 = por %p168, %p169
      %p171 = scmp.ne.s32.totalorder %s163, %s165
      %p172 = scmp.eq.s32.totalorder %s29, 1
      %p173 = por %p171, %p172
      %p174 = scmp.ne.s32.totalorder %s165, %s166
      %p175 = scmp.eq.s32.totalorder %s29, 0
      %p176 = por %p174, %p175
      %p177 = scmp.ne.s32.totalorder %s165, %s166
      %p178 = scmp.eq.s32.totalorder %s30, 1
      %p179 = por %p177, %p178
      %p181 = scmp.ne.s32.totalorder %s166, %s180
      %p182 = scmp.eq.s32.totalorder %s30, 0
      %p183 = por %p181, %p182
      %s185 = sadd.s32 %s184, 1
      %p188 = scmp.eq.s32.totalorder %s24, 1
      %p189 = scmp.ne.s32.totalorder %s184, %s186
      %p190 = scmp.eq.s32.totalorder %s24, 0
      %p191 = por %p189, %p190
      %p192 = scmp.ne.s32.totalorder %s184, %s186
      %p193 = scmp.eq.s32.totalorder %s29, 1
      %p194 = por %p192, %p193
      %p195 = scmp.ne.s32.totalorder %s186, %s187
      %p196 = scmp.eq.s32.totalorder %s29, 0
      %p197 = por %p195, %p196
      %p198 = scmp.ne.s32.totalorder %s186, %s187
      %p199 = scmp.eq.s32.totalorder %s30, 1
      %p200 = por %p198, %p199
      %p202 = scmp.ne.s32.totalorder %s187, %s201
      %p203 = scmp.eq.s32.totalorder %s30, 0
      %p204 = por %p202, %p203
      %s206 = sadd.s32 %s205, 1
      %p209 = scmp.eq.s32.totalorder %s24, 1
      %p210 = scmp.ne.s32.totalorder %s205, %s207
      %p211 = scmp.eq.s32.totalorder %s24, 0
      %p212 = por %p210, %p211
      %p213 = scmp.ne.s32.totalorder %s205, %s207
      %p214 = scmp.eq.s32.totalorder %s29, 1
      %p215 = por %p213, %p214
      %p216 = scmp.ne.s32.totalorder %s207, %s208
      %p217 = scmp.eq.s32.totalorder %s29, 0
      %p218 = por %p216, %p217
      %p219 = scmp.ne.s32.totalorder %s207, %s208
      %p220 = scmp.eq.s32.totalorder %s30, 1
      %p221 = por %p219, %p220
      %p223 = scmp.ne.s32.totalorder %s208, %s222
      %p224 = scmp.eq.s32.totalorder %s30, 0
      %p225 = por %p223, %p224
      %s227 = sadd.s32 %s226, 1
      %p230 = scmp.eq.s32.totalorder %s24, 1
      %p231 = scmp.ne.s32.totalorder %s226, %s228
      %p232 = scmp.eq.s32.totalorder %s24, 0
      %p233 = por %p231, %p232
      %p234 = scmp.ne.s32.totalorder %s226, %s228
      %p235 = scmp.eq.s32.totalorder %s29, 1
      %p236 = por %p234, %p235
      %p237 = scmp.ne.s32.totalorder %s228, %s229
      %p238 = scmp.eq.s32.totalorder %s29, 0
      %p239 = por %p237, %p238
      %p240 = scmp.ne.s32.totalorder %s228, %s229
      %p241 = scmp.eq.s32.totalorder %s30, 1
      %p242 = por %p240, %p241
      %p244 = scmp.ne.s32.totalorder %s229, %s243
      %p245 = scmp.eq.s32.totalorder %s30, 0
      %p246 = por %p244, %p245
      %s247 = ssub.s32 %s24, %s31
      %p248 = scmp.eq.s32.totalorder %s247, 0
      %s250 = sadd.s32 %s249, 1
      %s251 = scalar_select %p248, %s249, %s250
      %p254 = pneg %p248
      %p255 = scmp.eq.s32.totalorder %s24, 1
      %p256 = por %p254, %p255
      %p257 = scmp.ne.s32.totalorder %s249, %s252
      %p258 = scmp.eq.s32.totalorder %s24, 0
      %p259 = por %p257, %p258
      %p260 = scmp.ne.s32.totalorder %s249, %s252
      %p261 = scmp.eq.s32.totalorder %s29, 1
      %p262 = por %p260, %p261
      %p263 = scmp.ne.s32.totalorder %s252, %s253
      %p264 = scmp.eq.s32.totalorder %s29, 0
      %p265 = por %p263, %p264
      %p266 = scmp.ne.s32.totalorder %s252, %s253
      %p267 = scmp.eq.s32.totalorder %s30, 1
      %p268 = por %p266, %p267
      %p270 = scmp.ne.s32.totalorder %s253, %s269
      %p271 = scmp.eq.s32.totalorder %s30, 0
      %p272 = por %p270, %p271
      %p273 = scmp.le.s32.totalorder 1, %s24
      %p274 = scmp.lt.s32.totalorder %s24, 3
      %p275 = pnand %p273, %p274
      %p276 = pneg %p275
      // Predicated region
      $region9: #{tpu_custom_call.1} parent=5 // pred_check
        _
      $region10: #{tpu_custom_call.1} parent=5 // pred_check_branch
        %278 = sbr.rel (%p275) target = $region12
      $region11: #{tpu_custom_call.1} parent=5 // pred_region
        %s279 = ssub.s32 %s24, 1
        // Predicated region
        $region13: #{tpu_custom_call.1} parent=11 // pred_check
          %p280 = pneg %p71
        $region14: #{tpu_custom_call.1} parent=11 // pred_check_branch
          %282 = sbr.rel (%p280) target = $region16
        $region15: #{tpu_custom_call.1} parent=11 // pred_region
          %s284 = ssub.s32 7168, 7168
          %285 = vsyncadd [#allocation6], %s284
          %s286 = sshll.u32 [#allocation5], 4
          %s287 = int_to_ptr.vmem [resolvable:$true] %s286
          %292 = dma.hbm_to_vmem [thread:$0]  %s1, 7168, %s287, [#allocation6], 64, 64, 4
        $region16: #{tpu_custom_call.1} parent=11 // pred_fallthru
          _
        // Predicated region
        $region17: #{tpu_custom_call.1} parent=11 // pred_check
          %p293 = pneg %p92
        $region18: #{tpu_custom_call.1} parent=11 // pred_check_branch
          %295 = sbr.rel (%p293) target = $region20
        $region19: #{tpu_custom_call.1} parent=11 // pred_region
          _
        $region20: #{tpu_custom_call.1} parent=11 // pred_fallthru
          _
        // Predicated region
        $region21: #{tpu_custom_call.1} parent=11 // pred_check
          %p296 = pneg %p113
        $region22: #{tpu_custom_call.1} parent=11 // pred_check_branch
          %298 = sbr.rel (%p296) target = $region24
        $region23: #{tpu_custom_call.1} parent=11 // pred_region
          %s300 = ssub.s32 3072, 3072
          %301 = vsyncadd [#allocation6], %s300
          %s302 = sshll.u32 [#allocation7], 4
          %s303 = int_to_ptr.vmem [resolvable:$true] %s302
          %308 = dma.hbm_to_vmem [thread:$0]  %s3, 3072, %s303, [#allocation6], 64, 64, 4
        $region24: #{tpu_custom_call.1} parent=11 // pred_fallthru
          _
        // Predicated region
        $region25: #{tpu_custom_call.1} parent=11 // pred_check
          %p309 = pneg %p134
        $region26: #{tpu_custom_call.1} parent=11 // pred_check_branch
          %311 = sbr.rel (%p309) target = $region28
        $region27: #{tpu_custom_call.1} parent=11 // pred_region
          _
        $region28: #{tpu_custom_call.1} parent=11 // pred_fallthru
          _
        // Predicated region
        $region29: #{tpu_custom_call.1} parent=11 // pred_check
          %p312 = pneg %p155
        $region30: #{tpu_custom_call.1} parent=11 // pred_check_branch
          %314 = sbr.rel (%p312) target = $region32
        $region31: #{tpu_custom_call.1} parent=11 // pred_region
          _
        $region32: #{tpu_custom_call.1} parent=11 // pred_fallthru
          _
        // Predicated region
        $region33: #{tpu_custom_call.1} parent=11 // pred_check
          %p315 = pneg %p176
        $region34: #{tpu_custom_call.1} parent=11 // pred_check_branch
          %317 = sbr.rel (%p315) target = $region36
        $region35: #{tpu_custom_call.1} parent=11 // pred_region
          %s319 = ssub.s32 1024, 1024
          %320 = vsyncadd [#allocation9], %s319
          %s321 = sshll.u32 [#allocation8], 4
          %s322 = int_to_ptr.vmem [resolvable:$true] %s321
          %327 = dma.hbm_to_vmem [thread:$0]  %s6, 1024, %s322, [#allocation9], 64, 64, 4
        $region36: #{tpu_custom_call.1} parent=11 // pred_fallthru
          _
        // Predicated region
        $region37: #{tpu_custom_call.1} parent=11 // pred_check
          %p328 = pneg %p197
        $region38: #{tpu_custom_call.1} parent=11 // pred_check_branch
          %330 = sbr.rel (%p328) target = $region40
        $region39: #{tpu_custom_call.1} parent=11 // pred_region
          _
        $region40: #{tpu_custom_call.1} parent=11 // pred_fallthru
          _
        // Predicated region
        $region41: #{tpu_custom_call.1} parent=11 // pred_check
          %p331 = pneg %p218
        $region42: #{tpu_custom_call.1} parent=11 // pred_check_branch
          %333 = sbr.rel (%p331) target = $region44
        $region43: #{tpu_custom_call.1} parent=11 // pred_region
          %s335 = ssub.s32 1024, 1024
          %336 = vsyncadd [#allocation9], %s335
          %s337 = sshll.u32 [#allocation10], 4
          %s338 = int_to_ptr.vmem [resolvable:$true] %s337
          %343 = dma.hbm_to_vmem [thread:$0]  %s8, 1024, %s338, [#allocation9], 64, 64, 4
        $region44: #{tpu_custom_call.1} parent=11 // pred_fallthru
          _
        // Predicated region
        $region45: #{tpu_custom_call.1} parent=11 // pred_check
          %p344 = pneg %p239
        $region46: #{tpu_custom_call.1} parent=11 // pred_check_branch
          %346 = sbr.rel (%p344) target = $region48
        $region47: #{tpu_custom_call.1} parent=11 // pred_region
          _
        $region48: #{tpu_custom_call.1} parent=11 // pred_fallthru
          _
      $region12: #{tpu_custom_call.1} parent=5 // pred_fallthru
        _
      %p347 = scmp.lt.s32.totalorder %s24, 2
      // Predicated region
      $region49: #{tpu_custom_call.1} parent=5 // pred_check
        %p348 = pneg %p347
      $region50: #{tpu_custom_call.1} parent=5 // pred_check_branch
        %350 = sbr.rel (%p348) target = $region52
      $region51: #{tpu_custom_call.1} parent=5 // pred_region
        // Predicated region
        $region53: #{tpu_custom_call.1} parent=51 // pred_check
          %p351 = pneg %p44
        $region54: #{tpu_custom_call.1} parent=51 // pred_check_branch
          %353 = sbr.rel (%p351) target = $region56
        $region55: #{tpu_custom_call.1} parent=51 // pred_region
          %s354 = sand.u32 %s34, 1
          %s355 = scalar_lea.sflag [#allocation3], %s354
          %s356 = sand.u32 %s34, 1
          %s357 = smul.addr %s356, 128
          %s358 = scalar_lea.vmem [#allocation2], %s357
          %s359 = smul.u32 8, %s24
          %s361 = ssub.s32 2048, 2048
          %362 = vsyncadd %s355, %s361
          %s363 = smul.addr %s359, 2
          %s364 = smul.addr %s363, 128
          %s365 = scalar_lea.hbm %s0, %s364
          %s366 = sshll.u32 %s358, 4
          %s367 = int_to_ptr.vmem [resolvable:$true] %s366
          %372 = dma.hbm_to_vmem [thread:$0]  %s365, 2048, %s367, %s355, 128, 128, 8
        $region56: #{tpu_custom_call.1} parent=51 // pred_fallthru
          _
      $region52: #{tpu_custom_call.1} parent=5 // pred_fallthru
        _
      %p373 = scmp.le.s32.totalorder 1, %s24
      %p374 = scmp.lt.s32.totalorder %s24, 3
      %p375 = pnand %p373, %p374
      %p376 = pneg %p375
      // Predicated region
      $region57: #{tpu_custom_call.1} parent=5 // pred_check
        _
      $region58: #{tpu_custom_call.1} parent=5 // pred_check_branch
        %378 = sbr.rel (%p375) target = $region60
      $region59: #{tpu_custom_call.1} parent=5 // pred_region
        %s379 = ssub.s32 %s24, 1
        %s380 = sand.u32 %s37, 1
        %s381 = scalar_lea.sflag [#allocation3], %s380
        %s382 = sand.u32 %s37, 1
        %s383 = smul.addr %s382, 128
        %s384 = scalar_lea.vmem [#allocation2], %s383
        // Predicated region
        $region61: #{tpu_custom_call.1} parent=59 // pred_check
          %p385 = pneg %p50
        $region62: #{tpu_custom_call.1} parent=59 // pred_check_branch
          %387 = sbr.rel (%p385) target = $region64
        $region63: #{tpu_custom_call.1} parent=59 // pred_region
          %388 = dma.done %s381, 2048
        $region64: #{tpu_custom_call.1} parent=59 // pred_fallthru
          _
        // Predicated region
        $region65: #{tpu_custom_call.1} parent=59 // pred_check
          %p389 = pneg %p71
        $region66: #{tpu_custom_call.1} parent=59 // pred_check_branch
          %391 = sbr.rel (%p389) target = $region68
        $region67: #{tpu_custom_call.1} parent=59 // pred_region
          %392 = dma.done [#allocation6], 7168
        $region68: #{tpu_custom_call.1} parent=59 // pred_fallthru
          _
        // Predicated region
        $region69: #{tpu_custom_call.1} parent=59 // pred_check
          %p393 = pneg %p113
        $region70: #{tpu_custom_call.1} parent=59 // pred_check_branch
          %395 = sbr.rel (%p393) target = $region72
        $region71: #{tpu_custom_call.1} parent=59 // pred_region
          %396 = dma.done [#allocation6], 3072
        $region72: #{tpu_custom_call.1} parent=59 // pred_fallthru
          _
        // Predicated region
        $region73: #{tpu_custom_call.1} parent=59 // pred_check
          %p397 = pneg %p176
        $region74: #{tpu_custom_call.1} parent=59 // pred_check_branch
          %399 = sbr.rel (%p397) target = $region76
        $region75: #{tpu_custom_call.1} parent=59 // pred_region
          %400 = dma.done [#allocation9], 1024
        $region76: #{tpu_custom_call.1} parent=59 // pred_fallthru
          _
        // Predicated region
        $region77: #{tpu_custom_call.1} parent=59 // pred_check
          %p401 = pneg %p218
        $region78: #{tpu_custom_call.1} parent=59 // pred_check_branch
          %403 = sbr.rel (%p401) target = $region80
        $region79: #{tpu_custom_call.1} parent=59 // pred_region
          %404 = dma.done [#allocation9], 1024
        $region80: #{tpu_custom_call.1} parent=59 // pred_fallthru
          _
        %s405 = sand.u32 %s37, 1
        %s406 = scalar_lea.sflag [#allocation3], %s405
        %s407 = sand.u32 %s37, 1
        %s408 = smul.addr %s407, 128
        %s409 = scalar_lea.vmem [#allocation2], %s408
        %p410 = pneg %p50
        %p411 = pneg %p47
        %p412 = pneg %p71
        %p413 = pneg %p68
        %p414 = pneg %p92
        %p415 = pneg %p89
        %p416 = pneg %p113
        %p417 = pneg %p110
        %p418 = pneg %p134
        %p419 = pneg %p131
        %p420 = pneg %p155
        %p421 = pneg %p152
        %p422 = pneg %p176
        %p423 = pneg %p173
        %p424 = pneg %p197
        %p425 = pneg %p194
        %p426 = pneg %p218
        %p427 = pneg %p215
        %p428 = pneg %p239
        %p429 = pneg %p236
        %p430 = pneg %p265
        %p431 = pneg %p262
        %s432 = sand.u32 %s252, 1
        %s433 = scalar_lea.sflag [#allocation4], %s432
        %s434 = sand.u32 %s252, 1
        %s435 = smul.addr %s434, 8
        %s436 = scalar_lea.vmem [#allocation11], %s435
        %s437 = smul.u32 8, %s29
        %v439 = vld [vmem:[%s384] sm:$0xff]
        %v440 = vld [vmem:[%s384 + $0x8] sm:$0xff]
        %v441 = vld [vmem:[%s384 + $0x10] sm:$0xff]
        %v442 = vld [vmem:[%s384 + $0x18] sm:$0xff]
        %v443 = vld [vmem:[%s384 + $0x20] sm:$0xff]
        %v444 = vld [vmem:[%s384 + $0x28] sm:$0xff]
        %v445 = vld [vmem:[%s384 + $0x30] sm:$0xff]
        %v446 = vld [vmem:[%s384 + $0x38] sm:$0xff]
        %v447 = vld [vmem:[%s384 + $0x40] sm:$0xff]
        %v448 = vld [vmem:[%s384 + $0x48] sm:$0xff]
        %v449 = vld [vmem:[%s384 + $0x50] sm:$0xff]
        %v450 = vld [vmem:[%s384 + $0x58] sm:$0xff]
        %v451 = vld [vmem:[%s384 + $0x60] sm:$0xff]
        %v452 = vld [vmem:[%s384 + $0x68] sm:$0xff]
        %v453 = vld [vmem:[%s384 + $0x70] sm:$0xff]
        %v454 = vld [vmem:[%s384 + $0x78] sm:$0xff]
        %v455 = vpack.c.bf16 %v440, %v439
        %v456 = vpack.c.bf16 %v442, %v441
        %v457 = vpack.c.bf16 %v444, %v443
        %v458 = vpack.c.bf16 %v446, %v445
        %v459 = vpack.c.bf16 %v448, %v447
        %v460 = vpack.c.bf16 %v450, %v449
        %v461 = vpack.c.bf16 %v452, %v451
        %v462 = vpack.c.bf16 %v454, %v453
        %v463 = vld [vmem:[#allocation5] sm:$0xf]
        %v464 = vld [vmem:[#allocation5 + $0x4] sm:$0xf]
        %v465 = vld [vmem:[#allocation5 + $0x8] sm:$0xf]
        %v466 = vld [vmem:[#allocation5 + $0xc] sm:$0xf]
        %v467 = vld [vmem:[#allocation5 + $0x10] sm:$0xf]
        %v468 = vld [vmem:[#allocation5 + $0x14] sm:$0xf]
        %v469 = vld [vmem:[#allocation5 + $0x18] sm:$0xf]
        %v470 = vld [vmem:[#allocation5 + $0x1c] sm:$0xf]
        %v471 = vld [vmem:[#allocation5 + $0x20] sm:$0xf]
        %v472 = vld [vmem:[#allocation5 + $0x24] sm:$0xf]
        %v473 = vld [vmem:[#allocation5 + $0x28] sm:$0xf]
        %v474 = vld [vmem:[#allocation5 + $0x2c] sm:$0xf]
        %v475 = vld [vmem:[#allocation5 + $0x30] sm:$0xf]
        %v476 = vld [vmem:[#allocation5 + $0x34] sm:$0xf]
        %v477 = vld [vmem:[#allocation5 + $0x38] sm:$0xf]
        %v478 = vld [vmem:[#allocation5 + $0x3c] sm:$0xf]
        %v479 = vld [vmem:[#allocation5 + $0x40] sm:$0xf]
        %v480 = vld [vmem:[#allocation5 + $0x44] sm:$0xf]
        %v481 = vld [vmem:[#allocation5 + $0x48] sm:$0xf]
        %v482 = vld [vmem:[#allocation5 + $0x4c] sm:$0xf]
        %v483 = vld [vmem:[#allocation5 + $0x50] sm:$0xf]
        %v484 = vld [vmem:[#allocation5 + $0x54] sm:$0xf]
        %v485 = vld [vmem:[#allocation5 + $0x58] sm:$0xf]
        %v486 = vld [vmem:[#allocation5 + $0x5c] sm:$0xf]
        %v487 = vld [vmem:[#allocation5 + $0x60] sm:$0xf]
        %v488 = vld [vmem:[#allocation5 + $0x64] sm:$0xf]
        %v489 = vld [vmem:[#allocation5 + $0x68] sm:$0xf]
        %v490 = vld [vmem:[#allocation5 + $0x6c] sm:$0xf]
        %v491 = vld [vmem:[#allocation5 + $0x70] sm:$0xf]
        %v492 = vld [vmem:[#allocation5 + $0x74] sm:$0xf]
        %v493 = vld [vmem:[#allocation5 + $0x78] sm:$0xf]
        %v494 = vld [vmem:[#allocation5 + $0x7c] sm:$0xf]
        %v511 = vunpack.c.l.b16 %v479
        %v512 = vunpack.c.l.b16 %v480
        %v513 = vunpack.c.l.b16 %v481
        %v514 = vunpack.c.l.b16 %v482
        %v515 = vunpack.c.l.b16 %v483
        %v516 = vunpack.c.l.b16 %v484
        %v517 = vunpack.c.l.b16 %v485
        %v518 = vunpack.c.l.b16 %v486
        %v519 = vunpack.c.l.b16 %v487
        %v520 = vunpack.c.l.b16 %v488
        %v521 = vunpack.c.l.b16 %v489
        %v522 = vunpack.c.l.b16 %v490
        %v523 = vunpack.c.l.b16 %v491
        %v524 = vunpack.c.l.b16 %v492
        %v525 = vunpack.c.l.b16 %v493
        %v526 = vunpack.c.l.b16 %v494
        %v527 = vpack.c.b16 %v512, %v511
        %v528 = vpack.c.b16 %v514, %v513
        %v529 = vpack.c.b16 %v516, %v515
        %v530 = vpack.c.b16 %v518, %v517
        %v531 = vpack.c.b16 %v520, %v519
        %v532 = vpack.c.b16 %v522, %v521
        %v533 = vpack.c.b16 %v524, %v523
        %v534 = vpack.c.b16 %v526, %v525
        %543 = vmatprep.subr.bf16.mxu0 0
        %544 = vmatpush1.bf16.msra.mxu0 %v527
        %545 = vmatprep.subr.bf16.mxu0 0
        %546 = vmatpush1.bf16.msra.mxu0 %v528
        %547 = vmatprep.subr.bf16.mxu0 0
        %548 = vmatpush1.bf16.msra.mxu0 %v529
        %549 = vmatprep.subr.bf16.mxu0 0
        %550 = vmatpush1.bf16.msra.mxu0 %v530
        %551 = vmatprep.subr.bf16.mxu0 0
        %552 = vmatpush1.bf16.msra.mxu0 %v531
        %553 = vmatprep.subr.bf16.mxu0 0
        %554 = vmatpush1.bf16.msra.mxu0 %v532
        %555 = vmatprep.subr.bf16.mxu0 0
        %556 = vmatpush1.bf16.msra.mxu0 %v533
        %557 = vmatprep.subr.bf16.mxu0 0
        %558 = vmatpush1.bf16.msra.mxu0 %v534
        %559 = vmatprep.subr.bf16.mxu0 0
        %560 = vmatpush1.bf16.msra.mxu0 0
        %561 = vmatprep.subr.bf16.mxu0 0
        %562 = vmatpush1.bf16.msra.mxu0 0
        %563 = vmatprep.subr.bf16.mxu0 0
        %564 = vmatpush1.bf16.msra.mxu0 0
        %565 = vmatprep.subr.bf16.mxu0 0
        %566 = vmatpush1.bf16.msra.mxu0 0
        %567 = vmatprep.subr.bf16.mxu0 0
        %568 = vmatpush1.bf16.msra.mxu0 0
        %569 = vmatprep.subr.bf16.mxu0 0
        %570 = vmatpush1.bf16.msra.mxu0 0
        %571 = vmatprep.subr.bf16.mxu0 0
        %572 = vmatpush1.bf16.msra.mxu0 0
        %573 = vmatprep.subr.bf16.mxu0 0
        %574 = vmatpush1.bf16.msra.mxu0 0
        %575 = vmatprep.mubr.bf16.mxu0 0
        %576 = vmatmul.mubr.bf16.gmra.mrb[0].mxu0 %v455
        %v577 = vpop.f32.mrb[0].mxu0
        %v578 = vadd.f32 0.0, %v577
        %v579 = vpop.f32.mrb[0].mxu0
        %v580 = vpop.f32.mrb[0].mxu0
        %v581 = vadd.f32 0.0, %v580
        %v582 = vpop.f32.mrb[0].mxu0
        %583 = vmatprep.mubr.bf16.mxu0 0
        %584 = vmatmul.mubr.bf16.gmra.mrb[0].mxu0 %v456
        %v585 = vpop.f32.mrb[0].mxu0
        %v586 = vadd.f32 0.0, %v585
        %v587 = vpop.f32.mrb[0].mxu0
        %v588 = vpop.f32.mrb[0].mxu0
        %v589 = vadd.f32 0.0, %v588
        %v590 = vpop.f32.mrb[0].mxu0
        %591 = vmatprep.mubr.bf16.mxu0 0
        %592 = vmatmul.mubr.bf16.gmra.mrb[0].mxu0 %v457
        %v593 = vpop.f32.mrb[0].mxu0
        %v594 = vadd.f32 0.0, %v593
        %v595 = vpop.f32.mrb[0].mxu0
        %v596 = vpop.f32.mrb[0].mxu0
        %v597 = vadd.f32 0.0, %v596
        %v598 = vpop.f32.mrb[0].mxu0
        %599 = vmatprep.mubr.bf16.mxu0 0
        %600 = vmatmul.mubr.bf16.gmra.mrb[0].mxu0 %v458
        %v601 = vpop.f32.mrb[0].mxu0
        %v602 = vadd.f32 0.0, %v601
        %v603 = vpop.f32.mrb[0].mxu0
        %v604 = vpop.f32.mrb[0].mxu0
        %v605 = vadd.f32 0.0, %v604
        %v606 = vpop.f32.mrb[0].mxu0
        %607 = vmatprep.mubr.bf16.mxu0 0
        %608 = vmatmul.mubr.bf16.gmra.mrb[0].mxu0 %v459
        %v609 = vpop.f32.mrb[0].mxu0
        %v610 = vadd.f32 0.0, %v609
        %v611 = vpop.f32.mrb[0].mxu0
        %v612 = vpop.f32.mrb[0].mxu0
        %v613 = vadd.f32 0.0, %v612
        %v614 = vpop.f32.mrb[0].mxu0
        %615 = vmatprep.mubr.bf16.mxu0 0
        %616 = vmatmul.mubr.bf16.gmra.mrb[0].mxu0 %v460
        %v617 = vpop.f32.mrb[0].mxu0
        %v618 = vadd.f32 0.0, %v617
        %v619 = vpop.f32.mrb[0].mxu0
        %v620 = vpop.f32.mrb[0].mxu0
        %v621 = vadd.f32 0.0, %v620
        %v622 = vpop.f32.mrb[0].mxu0
        %623 = vmatprep.mubr.bf16.mxu0 0
        %624 = vmatmul.mubr.bf16.gmra.mrb[0].mxu0 %v461
        %v625 = vpop.f32.mrb[0].mxu0
        %v626 = vadd.f32 0.0, %v625
        %v627 = vpop.f32.mrb[0].mxu0
        %v628 = vpop.f32.mrb[0].mxu0
        %v629 = vadd.f32 0.0, %v628
        %v630 = vpop.f32.mrb[0].mxu0
        %631 = vmatprep.mubr.bf16.mxu0 0
        %632 = vmatmul.mubr.bf16.gmra.mrb[0].mxu0 %v462
        %v633 = vpop.f32.mrb[0].mxu0
        %v634 = vadd.f32 0.0, %v633
        %v635 = vpop.f32.mrb[0].mxu0
        %v636 = vpop.f32.mrb[0].mxu0
        %v637 = vadd.f32 0.0, %v636
        %v638 = vpop.f32.mrb[0].mxu0
        %639 = vdwg.mxu0
        %v640 = vrot.slane %v578, 1
        %v641 = vrot.slane %v581, 1
        %v642 = vrot.slane %v586, 1
        %v643 = vrot.slane %v589, 1
        %v644 = vrot.slane %v594, 1
        %v645 = vrot.slane %v597, 1
        %v646 = vrot.slane %v602, 1
        %v647 = vrot.slane %v605, 1
        %v648 = vrot.slane %v610, 1
        %v649 = vrot.slane %v613, 1
        %v650 = vrot.slane %v618, 1
        %v651 = vrot.slane %v621, 1
        %v652 = vrot.slane %v626, 1
        %v653 = vrot.slane %v629, 1
        %v654 = vrot.slane %v634, 1
        %v655 = vrot.slane %v637, 1
        %v656 = vlaneseq
        %v657 = vshrl.u32 %v656, 7
        %vm658 = vcmp.lt.s32.totalorder %v657, 7
        %v659 = vsel %vm658, %v654, %v655
        %v660 = vsel %vm658, %v653, %v654
        %v661 = vsel %vm658, %v652, %v653
        %v662 = vsel %vm658, %v651, %v652
        %v663 = vsel %vm658, %v650, %v651
        %v664 = vsel %vm658, %v649, %v650
        %v665 = vsel %vm658, %v648, %v649
        %v666 = vsel %vm658, %v647, %v648
        %v667 = vsel %vm658, %v646, %v647
        %v668 = vsel %vm658, %v645, %v646
        %v669 = vsel %vm658, %v644, %v645
        %v670 = vsel %vm658, %v643, %v644
        %v671 = vsel %vm658, %v642, %v643
        %v672 = vsel %vm658, %v641, %v642
        %v673 = vsel %vm658, %v640, %v641
        %v674 = vsel %vm658, %v655, %v640
        %v691 = vunpack.c.l.b16 %v463
        %v692 = vunpack.c.l.b16 %v464
        %v693 = vunpack.c.l.b16 %v465
        %v694 = vunpack.c.l.b16 %v466
        %v695 = vunpack.c.l.b16 %v467
        %v696 = vunpack.c.l.b16 %v468
        %v697 = vunpack.c.l.b16 %v469
        %v698 = vunpack.c.l.b16 %v470
        %v699 = vunpack.c.l.b16 %v471
        %v700 = vunpack.c.l.b16 %v472
        %v701 = vunpack.c.l.b16 %v473
        %v702 = vunpack.c.l.b16 %v474
        %v703 = vunpack.c.l.b16 %v475
        %v704 = vunpack.c.l.b16 %v476
        %v705 = vunpack.c.l.b16 %v477
        %v706 = vunpack.c.l.b16 %v478
        %v707 = vpack.c.b16 %v692, %v691
        %v708 = vpack.c.b16 %v694, %v693
        %v709 = vpack.c.b16 %v696, %v695
        %v710 = vpack.c.b16 %v698, %v697
        %v711 = vpack.c.b16 %v700, %v699
        %v712 = vpack.c.b16 %v702, %v701
        %v713 = vpack.c.b16 %v704, %v703
        %v714 = vpack.c.b16 %v706, %v705
        %723 = vmatprep.subr.bf16.mxu0 0
        %724 = vmatpush1.bf16.msra.mxu0 %v707
        %725 = vmatprep.subr.bf16.mxu0 0
        %726 = vmatpush1.bf16.msra.mxu0 %v708
        %727 = vmatprep.subr.bf16.mxu0 0
        %728 = vmatpush1.bf16.msra.mxu0 %v709
        %729 = vmatprep.subr.bf16.mxu0 0
        %730 = vmatpush1.bf16.msra.mxu0 %v710
        %731 = vmatprep.subr.bf16.mxu0 0
        %732 = vmatpush1.bf16.msra.mxu0 %v711
        %733 = vmatprep.subr.bf16.mxu0 0
        %734 = vmatpush1.bf16.msra.mxu0 %v712
        %735 = vmatprep.subr.bf16.mxu0 0
        %736 = vmatpush1.bf16.msra.mxu0 %v713
        %737 = vmatprep.subr.bf16.mxu0 0
        %738 = vmatpush1.bf16.msra.mxu0 %v714
        %739 = vmatprep.subr.bf16.mxu0 0
        %740 = vmatpush1.bf16.msra.mxu0 0
        %741 = vmatprep.subr.bf16.mxu0 0
        %742 = vmatpush1.bf16.msra.mxu0 0
        %743 = vmatprep.subr.bf16.mxu0 0
        %744 = vmatpush1.bf16.msra.mxu0 0
        %745 = vmatprep.subr.bf16.mxu0 0
        %746 = vmatpush1.bf16.msra.mxu0 0
        %747 = vmatprep.subr.bf16.mxu0 0
        %748 = vmatpush1.bf16.msra.mxu0 0
        %749 = vmatprep.subr.bf16.mxu0 0
        %750 = vmatpush1.bf16.msra.mxu0 0
        %751 = vmatprep.subr.bf16.mxu0 0
        %752 = vmatpush1.bf16.msra.mxu0 0
        %753 = vmatprep.subr.bf16.mxu0 0
        %754 = vmatpush1.bf16.msra.mxu0 0
        %755 = vmatprep.mubr.bf16.mxu0 0
        %756 = vmatmul.mubr.bf16.gmra.mrb[0].mxu0 %v455
        %v757 = vpop.f32.mrb[0].mxu0
        %v758 = vadd.f32 %v673, %v757
        %v759 = vpop.f32.mrb[0].mxu0
        %v760 = vpop.f32.mrb[0].mxu0
        %v761 = vadd.f32 %v672, %v760
        %v762 = vpop.f32.mrb[0].mxu0
        %763 = vmatprep.mubr.bf16.mxu0 0
        %764 = vmatmul.mubr.bf16.gmra.mrb[0].mxu0 %v456
        %v765 = vpop.f32.mrb[0].mxu0
        %v766 = vadd.f32 %v671, %v765
        %v767 = vpop.f32.mrb[0].mxu0
        %v768 = vpop.f32.mrb[0].mxu0
        %v769 = vadd.f32 %v670, %v768
        %v770 = vpop.f32.mrb[0].mxu0
        %771 = vmatprep.mubr.bf16.mxu0 0
        %772 = vmatmul.mubr.bf16.gmra.mrb[0].mxu0 %v457
        %v773 = vpop.f32.mrb[0].mxu0
        %v774 = vadd.f32 %v669, %v773
        %v775 = vpop.f32.mrb[0].mxu0
        %v776 = vpop.f32.mrb[0].mxu0
        %v777 = vadd.f32 %v668, %v776
        %v778 = vpop.f32.mrb[0].mxu0
        %779 = vmatprep.mubr.bf16.mxu0 0
        %780 = vmatmul.mubr.bf16.gmra.mrb[0].mxu0 %v458
        %v781 = vpop.f32.mrb[0].mxu0
        %v782 = vadd.f32 %v667, %v781
        %v783 = vpop.f32.mrb[0].mxu0
        %v784 = vpop.f32.mrb[0].mxu0
        %v785 = vadd.f32 %v666, %v784
        %v786 = vpop.f32.mrb[0].mxu0
        %787 = vmatprep.mubr.bf16.mxu0 0
        %788 = vmatmul.mubr.bf16.gmra.mrb[0].mxu0 %v459
        %v789 = vpop.f32.mrb[0].mxu0
        %v790 = vadd.f32 %v665, %v789
        %v791 = vpop.f32.mrb[0].mxu0
        %v792 = vpop.f32.mrb[0].mxu0
        %v793 = vadd.f32 %v664, %v792
        %v794 = vpop.f32.mrb[0].mxu0
        %795 = vmatprep.mubr.bf16.mxu0 0
        %796 = vmatmul.mubr.bf16.gmra.mrb[0].mxu0 %v460
        %v797 = vpop.f32.mrb[0].mxu0
        %v798 = vadd.f32 %v663, %v797
        %v799 = vpop.f32.mrb[0].mxu0
        %v800 = vpop.f32.mrb[0].mxu0
        %v801 = vadd.f32 %v662, %v800
        %v802 = vpop.f32.mrb[0].mxu0
        %803 = vmatprep.mubr.bf16.mxu0 0
        %804 = vmatmul.mubr.bf16.gmra.mrb[0].mxu0 %v461
        %v805 = vpop.f32.mrb[0].mxu0
        %v806 = vadd.f32 %v661, %v805
        %v807 = vpop.f32.mrb[0].mxu0
        %v808 = vpop.f32.mrb[0].mxu0
        %v809 = vadd.f32 %v660, %v808
        %v810 = vpop.f32.mrb[0].mxu0
        %811 = vmatprep.mubr.bf16.mxu0 0
        %812 = vmatmul.mubr.bf16.gmra.mrb[0].mxu0 %v462
        %v813 = vpop.f32.mrb[0].mxu0
        %v814 = vadd.f32 %v659, %v813
        %v815 = vpop.f32.mrb[0].mxu0
        %v816 = vpop.f32.mrb[0].mxu0
        %v817 = vadd.f32 %v674, %v816
        %v818 = vpop.f32.mrb[0].mxu0
        %819 = vdwg.mxu0
        %v820 = vld [vmem:[#allocation5 + $0x80] sm:$0xf]
        %v821 = vld [vmem:[#allocation5 + $0x84] sm:$0xf]
        %v822 = vld [vmem:[#allocation5 + $0x88] sm:$0xf]
        %v823 = vld [vmem:[#allocation5 + $0x8c] sm:$0xf]
        %v824 = vld [vmem:[#allocation5 + $0x90] sm:$0xf]
        %v825 = vld [vmem:[#allocation5 + $0x94] sm:$0xf]
        %v826 = vld [vmem:[#allocation5 + $0x98] sm:$0xf]
        %v827 = vld [vmem:[#allocation5 + $0x9c] sm:$0xf]
        %v828 = vld [vmem:[#allocation5 + $0xa0] sm:$0xf]
        %v829 = vld [vmem:[#allocation5 + $0xa4] sm:$0xf]
        %v830 = vld [vmem:[#allocation5 + $0xa8] sm:$0xf]
        %v831 = vld [vmem:[#allocation5 + $0xac] sm:$0xf]
        %v832 = vld [vmem:[#allocation5 + $0xb0] sm:$0xf]
        %v833 = vld [vmem:[#allocation5 + $0xb4] sm:$0xf]
        %v834 = vld [vmem:[#allocation5 + $0xb8] sm:$0xf]
        %v835 = vld [vmem:[#allocation5 + $0xbc] sm:$0xf]
        %v852 = vunpack.c.l.b16 %v820
        %v853 = vunpack.c.l.b16 %v821
        %v854 = vunpack.c.l.b16 %v822
        %v855 = vunpack.c.l.b16 %v823
        %v856 = vunpack.c.l.b16 %v824
        %v857 = vunpack.c.l.b16 %v825
        %v858 = vunpack.c.l.b16 %v826
        %v859 = vunpack.c.l.b16 %v827
        %v860 = vunpack.c.l.b16 %v828
        %v861 = vunpack.c.l.b16 %v829
        %v862 = vunpack.c.l.b16 %v830
        %v863 = vunpack.c.l.b16 %v831
        %v864 = vunpack.c.l.b16 %v832
        %v865 = vunpack.c.l.b16 %v833
        %v866 = vunpack.c.l.b16 %v834
        %v867 = vunpack.c.l.b16 %v835
        %v868 = vpack.c.b16 %v853, %v852
        %v869 = vpack.c.b16 %v855, %v854
        %v870 = vpack.c.b16 %v857, %v856
        %v871 = vpack.c.b16 %v859, %v858
        %v872 = vpack.c.b16 %v861, %v860
        %v873 = vpack.c.b16 %v863, %v862
        %v874 = vpack.c.b16 %v865, %v864
        %v875 = vpack.c.b16 %v867, %v866
        %884 = vmatprep.subr.bf16.mxu0 0
        %885 = vmatpush1.bf16.msra.mxu0 %v868
        %886 = vmatprep.subr.bf16.mxu0 0
        %887 = vmatpush1.bf16.msra.mxu0 %v869
        %888 = vmatprep.subr.bf16.mxu0 0
        %889 = vmatpush1.bf16.msra.mxu0 %v870
        %890 = vmatprep.subr.bf16.mxu0 0
        %891 = vmatpush1.bf16.msra.mxu0 %v871
        %892 = vmatprep.subr.bf16.mxu0 0
        %893 = vmatpush1.bf16.msra.mxu0 %v872
        %894 = vmatprep.subr.bf16.mxu0 0
        %895 = vmatpush1.bf16.msra.mxu0 %v873
        %896 = vmatprep.subr.bf16.mxu0 0
        %897 = vmatpush1.bf16.msra.mxu0 %v874
        %898 = vmatprep.subr.bf16.mxu0 0
        %899 = vmatpush1.bf16.msra.mxu0 %v875
        %900 = vmatprep.subr.bf16.mxu0 0
        %901 = vmatpush1.bf16.msra.mxu0 0
        %902 = vmatprep.subr.bf16.mxu0 0
        %903 = vmatpush1.bf16.msra.mxu0 0
        %904 = vmatprep.subr.bf16.mxu0 0
        %905 = vmatpush1.bf16.msra.mxu0 0
        %906 = vmatprep.subr.bf16.mxu0 0
        %907 = vmatpush1.bf16.msra.mxu0 0
        %908 = vmatprep.subr.bf16.mxu0 0
        %909 = vmatpush1.bf16.msra.mxu0 0
        %910 = vmatprep.subr.bf16.mxu0 0
        %911 = vmatpush1.bf16.msra.mxu0 0
        %912 = vmatprep.subr.bf16.mxu0 0
        %913 = vmatpush1.bf16.msra.mxu0 0
        %914 = vmatprep.subr.bf16.mxu0 0
        %915 = vmatpush1.bf16.msra.mxu0 0
        %916 = vmatprep.mubr.bf16.mxu0 0
        %917 = vmatmul.mubr.bf16.gmra.mrb[0].mxu0 %v455
        %v918 = vpop.f32.mrb[0].mxu0
        %v919 = vadd.f32 0.0, %v918
        %v920 = vpop.f32.mrb[0].mxu0
        %v921 = vpop.f32.mrb[0].mxu0
        %v922 = vadd.f32 0.0, %v921
        %v923 = vpop.f32.mrb[0].mxu0
        %924 = vmatprep.mubr.bf16.mxu0 0
        %925 = vmatmul.mubr.bf16.gmra.mrb[0].mxu0 %v456
        %v926 = vpop.f32.mrb[0].mxu0
        %v927 = vadd.f32 0.0, %v926
        %v928 = vpop.f32.mrb[0].mxu0
        %v929 = vpop.f32.mrb[0].mxu0
        %v930 = vadd.f32 0.0, %v929
        %v931 = vpop.f32.mrb[0].mxu0
        %932 = vmatprep.mubr.bf16.mxu0 0
        %933 = vmatmul.mubr.bf16.gmra.mrb[0].mxu0 %v457
        %v934 = vpop.f32.mrb[0].mxu0
        %v935 = vadd.f32 0.0, %v934
        %v936 = vpop.f32.mrb[0].mxu0
        %v937 = vpop.f32.mrb[0].mxu0
        %v938 = vadd.f32 0.0, %v937
        %v939 = vpop.f32.mrb[0].mxu0
        %940 = vmatprep.mubr.bf16.mxu0 0
        %941 = vmatmul.mubr.bf16.gmra.mrb[0].mxu0 %v458
        %v942 = vpop.f32.mrb[0].mxu0
        %v943 = vadd.f32 0.0, %v942
        %v944 = vpop.f32.mrb[0].mxu0
        %v945 = vpop.f32.mrb[0].mxu0
        %v946 = vadd.f32 0.0, %v945
        %v947 = vpop.f32.mrb[0].mxu0
        %948 = vmatprep.mubr.bf16.mxu0 0
        %949 = vmatmul.mubr.bf16.gmra.mrb[0].mxu0 %v459
        %v950 = vpop.f32.mrb[0].mxu0
        %v951 = vadd.f32 0.0, %v950
        %v952 = vpop.f32.mrb[0].mxu0
        %v953 = vpop.f32.mrb[0].mxu0
        %v954 = vadd.f32 0.0, %v953
        %v955 = vpop.f32.mrb[0].mxu0
        %956 = vmatprep.mubr.bf16.mxu0 0
        %957 = vmatmul.mubr.bf16.gmra.mrb[0].mxu0 %v460
        %v958 = vpop.f32.mrb[0].mxu0
        %v959 = vadd.f32 0.0, %v958
        %v960 = vpop.f32.mrb[0].mxu0
        %v961 = vpop.f32.mrb[0].mxu0
        %v962 = vadd.f32 0.0, %v961
        %v963 = vpop.f32.mrb[0].mxu0
        %964 = vmatprep.mubr.bf16.mxu0 0
        %965 = vmatmul.mubr.bf16.gmra.mrb[0].mxu0 %v461
        %v966 = vpop.f32.mrb[0].mxu0
        %v967 = vadd.f32 0.0, %v966
        %v968 = vpop.f32.mrb[0].mxu0
        %v969 = vpop.f32.mrb[0].mxu0
        %v970 = vadd.f32 0.0, %v969
        %v971 = vpop.f32.mrb[0].mxu0
        %972 = vmatprep.mubr.bf16.mxu0 0
        %973 = vmatmul.mubr.bf16.gmra.mrb[0].mxu0 %v462
        %v974 = vpop.f32.mrb[0].mxu0
        %v975 = vadd.f32 0.0, %v974
        %v976 = vpop.f32.mrb[0].mxu0
        %v977 = vpop.f32.mrb[0].mxu0
        %v978 = vadd.f32 0.0, %v977
        %v979 = vpop.f32.mrb[0].mxu0
        %980 = vdwg.mxu0
        %v981 = vrot.slane %v919, 2
        %v982 = vrot.slane %v922, 2
        %v983 = vrot.slane %v927, 2
        %v984 = vrot.slane %v930, 2
        %v985 = vrot.slane %v935, 2
        %v986 = vrot.slane %v938, 2
        %v987 = vrot.slane %v943, 2
        %v988 = vrot.slane %v946, 2
        %v989 = vrot.slane %v951, 2
        %v990 = vrot.slane %v954, 2
        %v991 = vrot.slane %v959, 2
        %v992 = vrot.slane %v962, 2
        %v993 = vrot.slane %v967, 2
        %v994 = vrot.slane %v970, 2
        %v995 = vrot.slane %v975, 2
        %v996 = vrot.slane %v978, 2
        %vm997 = vcmp.lt.s32.totalorder %v657, 6
        %v998 = vsel %vm997, %v995, %v996
        %v999 = vsel %vm997, %v994, %v995
        %v1000 = vsel %vm997, %v993, %v994
        %v1001 = vsel %vm997, %v992, %v993
        %v1002 = vsel %vm997, %v991, %v992
        %v1003 = vsel %vm997, %v990, %v991
        %v1004 = vsel %vm997, %v989, %v990
        %v1005 = vsel %vm997, %v988, %v989
        %v1006 = vsel %vm997, %v987, %v988
        %v1007 = vsel %vm997, %v986, %v987
        %v1008 = vsel %vm997, %v985, %v986
        %v1009 = vsel %vm997, %v984, %v985
        %v1010 = vsel %vm997, %v983, %v984
        %v1011 = vsel %vm997, %v982, %v983
        %v1012 = vsel %vm997, %v981, %v982
        %v1013 = vsel %vm997, %v996, %v981
        %v1014 = vadd.f32 %v758, %v1012
        %v1015 = vadd.f32 %v761, %v1011
        %v1016 = vadd.f32 %v766, %v1010
        %v1017 = vadd.f32 %v769, %v1009
        %v1018 = vadd.f32 %v774, %v1008
        %v1019 = vadd.f32 %v777, %v1007
        %v1020 = vadd.f32 %v782, %v1006
        %v1021 = vadd.f32 %v785, %v1005
        %v1022 = vadd.f32 %v790, %v1004
        %v1023 = vadd.f32 %v793, %v1003
        %v1024 = vadd.f32 %v798, %v1002
        %v1025 = vadd.f32 %v801, %v1001
        %v1026 = vadd.f32 %v806, %v1000
        %v1027 = vadd.f32 %v809, %v999
        %v1028 = vadd.f32 %v814, %v998
        %v1029 = vadd.f32 %v817, %v1013
        %v1030 = vld [vmem:[#allocation5 + $0xc0] sm:$0xf]
        %v1031 = vld [vmem:[#allocation5 + $0xc4] sm:$0xf]
        %v1032 = vld [vmem:[#allocation5 + $0xc8] sm:$0xf]
        %v1033 = vld [vmem:[#allocation5 + $0xcc] sm:$0xf]
        %v1034 = vld [vmem:[#allocation5 + $0xd0] sm:$0xf]
        %v1035 = vld [vmem:[#allocation5 + $0xd4] sm:$0xf]
        %v1036 = vld [vmem:[#allocation5 + $0xd8] sm:$0xf]
        %v1037 = vld [vmem:[#allocation5 + $0xdc] sm:$0xf]
        %v1038 = vld [vmem:[#allocation5 + $0xe0] sm:$0xf]
        %v1039 = vld [vmem:[#allocation5 + $0xe4] sm:$0xf]
        %v1040 = vld [vmem:[#allocation5 + $0xe8] sm:$0xf]
        %v1041 = vld [vmem:[#allocation5 + $0xec] sm:$0xf]
        %v1042 = vld [vmem:[#allocation5 + $0xf0] sm:$0xf]
        %v1043 = vld [vmem:[#allocation5 + $0xf4] sm:$0xf]
        %v1044 = vld [vmem:[#allocation5 + $0xf8] sm:$0xf]
        %v1045 = vld [vmem:[#allocation5 + $0xfc] sm:$0xf]
        %v1062 = vunpack.c.l.b16 %v1030
        %v1063 = vunpack.c.l.b16 %v1031
        %v1064 = vunpack.c.l.b16 %v1032
        %v1065 = vunpack.c.l.b16 %v1033
        %v1066 = vunpack.c.l.b16 %v1034
        %v1067 = vunpack.c.l.b16 %v1035
        %v1068 = vunpack.c.l.b16 %v1036
        %v1069 = vunpack.c.l.b16 %v1037
        %v1070 = vunpack.c.l.b16 %v1038
        %v1071 = vunpack.c.l.b16 %v1039
        %v1072 = vunpack.c.l.b16 %v1040
        %v1073 = vunpack.c.l.b16 %v1041
        %v1074 = vunpack.c.l.b16 %v1042
        %v1075 = vunpack.c.l.b16 %v1043
        %v1076 = vunpack.c.l.b16 %v1044
        %v1077 = vunpack.c.l.b16 %v1045
        %v1078 = vpack.c.b16 %v1063, %v1062
        %v1079 = vpack.c.b16 %v1065, %v1064
        %v1080 = vpack.c.b16 %v1067, %v1066
        %v1081 = vpack.c.b16 %v1069, %v1068
        %v1082 = vpack.c.b16 %v1071, %v1070
        %v1083 = vpack.c.b16 %v1073, %v1072
        %v1084 = vpack.c.b16 %v1075, %v1074
        %v1085 = vpack.c.b16 %v1077, %v1076
        %1094 = vmatprep.subr.bf16.mxu0 0
        %1095 = vmatpush1.bf16.msra.mxu0 %v1078
        %1096 = vmatprep.subr.bf16.mxu0 0
        %1097 = vmatpush1.bf16.msra.mxu0 %v1079
        %1098 = vmatprep.subr.bf16.mxu0 0
        %1099 = vmatpush1.bf16.msra.mxu0 %v1080
        %1100 = vmatprep.subr.bf16.mxu0 0
        %1101 = vmatpush1.bf16.msra.mxu0 %v1081
        %1102 = vmatprep.subr.bf16.mxu0 0
        %1103 = vmatpush1.bf16.msra.mxu0 %v1082
        %1104 = vmatprep.subr.bf16.mxu0 0
        %1105 = vmatpush1.bf16.msra.mxu0 %v1083
        %1106 = vmatprep.subr.bf16.mxu0 0
        %1107 = vmatpush1.bf16.msra.mxu0 %v1084
        %1108 = vmatprep.subr.bf16.mxu0 0
        %1109 = vmatpush1.bf16.msra.mxu0 %v1085
        %1110 = vmatprep.subr.bf16.mxu0 0
        %1111 = vmatpush1.bf16.msra.mxu0 0
        %1112 = vmatprep.subr.bf16.mxu0 0
        %1113 = vmatpush1.bf16.msra.mxu0 0
        %1114 = vmatprep.subr.bf16.mxu0 0
        %1115 = vmatpush1.bf16.msra.mxu0 0
        %1116 = vmatprep.subr.bf16.mxu0 0
        %1117 = vmatpush1.bf16.msra.mxu0 0
        %1118 = vmatprep.subr.bf16.mxu0 0
        %1119 = vmatpush1.bf16.msra.mxu0 0
        %1120 = vmatprep.subr.bf16.mxu0 0
        %1121 = vmatpush1.bf16.msra.mxu0 0
        %1122 = vmatprep.subr.bf16.mxu0 0
        %1123 = vmatpush1.bf16.msra.mxu0 0
        %1124 = vmatprep.subr.bf16.mxu0 0
        %1125 = vmatpush1.bf16.msra.mxu0 0
        %1126 = vmatprep.mubr.bf16.mxu0 0
        %1127 = vmatmul.mubr.bf16.gmra.mrb[0].mxu0 %v455
        %v1128 = vpop.f32.mrb[0].mxu0
        %v1129 = vadd.f32 0.0, %v1128
        %v1130 = vpop.f32.mrb[0].mxu0
        %v1131 = vpop.f32.mrb[0].mxu0
        %v1132 = vadd.f32 0.0, %v1131
        %v1133 = vpop.f32.mrb[0].mxu0
        %1134 = vmatprep.mubr.bf16.mxu0 0
        %1135 = vmatmul.mubr.bf16.gmra.mrb[0].mxu0 %v456
        %v1136 = vpop.f32.mrb[0].mxu0
        %v1137 = vadd.f32 0.0, %v1136
        %v1138 = vpop.f32.mrb[0].mxu0
        %v1139 = vpop.f32.mrb[0].mxu0
        %v1140 = vadd.f32 0.0, %v1139
        %v1141 = vpop.f32.mrb[0].mxu0
        %1142 = vmatprep.mubr.bf16.mxu0 0
        %1143 = vmatmul.mubr.bf16.gmra.mrb[0].mxu0 %v457
        %v1144 = vpop.f32.mrb[0].mxu0
        %v1145 = vadd.f32 0.0, %v1144
        %v1146 = vpop.f32.mrb[0].mxu0
        %v1147 = vpop.f32.mrb[0].mxu0
        %v1148 = vadd.f32 0.0, %v1147
        %v1149 = vpop.f32.mrb[0].mxu0
        %1150 = vmatprep.mubr.bf16.mxu0 0
        %1151 = vmatmul.mubr.bf16.gmra.mrb[0].mxu0 %v458
        %v1152 = vpop.f32.mrb[0].mxu0
        %v1153 = vadd.f32 0.0, %v1152
        %v1154 = vpop.f32.mrb[0].mxu0
        %v1155 = vpop.f32.mrb[0].mxu0
        %v1156 = vadd.f32 0.0, %v1155
        %v1157 = vpop.f32.mrb[0].mxu0
        %1158 = vmatprep.mubr.bf16.mxu0 0
        %1159 = vmatmul.mubr.bf16.gmra.mrb[0].mxu0 %v459
        %v1160 = vpop.f32.mrb[0].mxu0
        %v1161 = vadd.f32 0.0, %v1160
        %v1162 = vpop.f32.mrb[0].mxu0
        %v1163 = vpop.f32.mrb[0].mxu0
        %v1164 = vadd.f32 0.0, %v1163
        %v1165 = vpop.f32.mrb[0].mxu0
        %1166 = vmatprep.mubr.bf16.mxu0 0
        %1167 = vmatmul.mubr.bf16.gmra.mrb[0].mxu0 %v460
        %v1168 = vpop.f32.mrb[0].mxu0
        %v1169 = vadd.f32 0.0, %v1168
        %v1170 = vpop.f32.mrb[0].mxu0
        %v1171 = vpop.f32.mrb[0].mxu0
        %v1172 = vadd.f32 0.0, %v1171
        %v1173 = vpop.f32.mrb[0].mxu0
        %1174 = vmatprep.mubr.bf16.mxu0 0
        %1175 = vmatmul.mubr.bf16.gmra.mrb[0].mxu0 %v461
        %v1176 = vpop.f32.mrb[0].mxu0
        %v1177 = vadd.f32 0.0, %v1176
        %v1178 = vpop.f32.mrb[0].mxu0
        %v1179 = vpop.f32.mrb[0].mxu0
        %v1180 = vadd.f32 0.0, %v1179
        %v1181 = vpop.f32.mrb[0].mxu0
        %1182 = vmatprep.mubr.bf16.mxu0 0
        %1183 = vmatmul.mubr.bf16.gmra.mrb[0].mxu0 %v462
        %v1184 = vpop.f32.mrb[0].mxu0
        %v1185 = vadd.f32 0.0, %v1184
        %v1186 = vpop.f32.mrb[0].mxu0
        %v1187 = vpop.f32.mrb[0].mxu0
        %v1188 = vadd.f32 0.0, %v1187
        %v1189 = vpop.f32.mrb[0].mxu0
        %1190 = vdwg.mxu0
        %v1191 = vrot.slane %v1129, 3
        %v1192 = vrot.slane %v1132, 3
        %v1193 = vrot.slane %v1137, 3
        %v1194 = vrot.slane %v1140, 3
        %v1195 = vrot.slane %v1145, 3
        %v1196 = vrot.slane %v1148, 3
        %v1197 = vrot.slane %v1153, 3
        %v1198 = vrot.slane %v1156, 3
        %v1199 = vrot.slane %v1161, 3
        %v1200 = vrot.slane %v1164, 3
        %v1201 = vrot.slane %v1169, 3
        %v1202 = vrot.slane %v1172, 3
        %v1203 = vrot.slane %v1177, 3
        %v1204 = vrot.slane %v1180, 3
        %v1205 = vrot.slane %v1185, 3
        %v1206 = vrot.slane %v1188, 3
        %vm1207 = vcmp.lt.s32.totalorder %v657, 5
        %v1208 = vsel %vm1207, %v1205, %v1206
        %v1209 = vsel %vm1207, %v1204, %v1205
        %v1210 = vsel %vm1207, %v1203, %v1204
        %v1211 = vsel %vm1207, %v1202, %v1203
        %v1212 = vsel %vm1207, %v1201, %v1202
        %v1213 = vsel %vm1207, %v1200, %v1201
        %v1214 = vsel %vm1207, %v1199, %v1200
        %v1215 = vsel %vm1207, %v1198, %v1199
        %v1216 = vsel %vm1207, %v1197, %v1198
        %v1217 = vsel %vm1207, %v1196, %v1197
        %v1218 = vsel %vm1207, %v1195, %v1196
        %v1219 = vsel %vm1207, %v1194, %v1195
        %v1220 = vsel %vm1207, %v1193, %v1194
        %v1221 = vsel %vm1207, %v1192, %v1193
        %v1222 = vsel %vm1207, %v1191, %v1192
        %v1223 = vsel %vm1207, %v1206, %v1191
        %v1224 = vadd.f32 %v1014, %v1222
        %v1225 = vadd.f32 %v1015, %v1221
        %v1226 = vadd.f32 %v1016, %v1220
        %v1227 = vadd.f32 %v1017, %v1219
        %v1228 = vadd.f32 %v1018, %v1218
        %v1229 = vadd.f32 %v1019, %v1217
        %v1230 = vadd.f32 %v1020, %v1216
        %v1231 = vadd.f32 %v1021, %v1215
        %v1232 = vadd.f32 %v1022, %v1214
        %v1233 = vadd.f32 %v1023, %v1213
        %v1234 = vadd.f32 %v1024, %v1212
        %v1235 = vadd.f32 %v1025, %v1211
        %v1236 = vadd.f32 %v1026, %v1210
        %v1237 = vadd.f32 %v1027, %v1209
        %v1238 = vadd.f32 %v1028, %v1208
        %v1239 = vadd.f32 %v1029, %v1223
        %v1240 = vld [vmem:[#allocation5 + $0x100] sm:$0xf]
        %v1241 = vld [vmem:[#allocation5 + $0x104] sm:$0xf]
        %v1242 = vld [vmem:[#allocation5 + $0x108] sm:$0xf]
        %v1243 = vld [vmem:[#allocation5 + $0x10c] sm:$0xf]
        %v1244 = vld [vmem:[#allocation5 + $0x110] sm:$0xf]
        %v1245 = vld [vmem:[#allocation5 + $0x114] sm:$0xf]
        %v1246 = vld [vmem:[#allocation5 + $0x118] sm:$0xf]
        %v1247 = vld [vmem:[#allocation5 + $0x11c] sm:$0xf]
        %v1248 = vld [vmem:[#allocation5 + $0x120] sm:$0xf]
        %v1249 = vld [vmem:[#allocation5 + $0x124] sm:$0xf]
        %v1250 = vld [vmem:[#allocation5 + $0x128] sm:$0xf]
        %v1251 = vld [vmem:[#allocation5 + $0x12c] sm:$0xf]
        %v1252 = vld [vmem:[#allocation5 + $0x130] sm:$0xf]
        %v1253 = vld [vmem:[#allocation5 + $0x134] sm:$0xf]
        %v1254 = vld [vmem:[#allocation5 + $0x138] sm:$0xf]
        %v1255 = vld [vmem:[#allocation5 + $0x13c] sm:$0xf]
        %v1272 = vunpack.c.l.b16 %v1240
        %v1273 = vunpack.c.l.b16 %v1241
        %v1274 = vunpack.c.l.b16 %v1242
        %v1275 = vunpack.c.l.b16 %v1243
        %v1276 = vunpack.c.l.b16 %v1244
        %v1277 = vunpack.c.l.b16 %v1245
        %v1278 = vunpack.c.l.b16 %v1246
        %v1279 = vunpack.c.l.b16 %v1247
        %v1280 = vunpack.c.l.b16 %v1248
        %v1281 = vunpack.c.l.b16 %v1249
        %v1282 = vunpack.c.l.b16 %v1250
        %v1283 = vunpack.c.l.b16 %v1251
        %v1284 = vunpack.c.l.b16 %v1252
        %v1285 = vunpack.c.l.b16 %v1253
        %v1286 = vunpack.c.l.b16 %v1254
        %v1287 = vunpack.c.l.b16 %v1255
        %v1288 = vpack.c.b16 %v1273, %v1272
        %v1289 = vpack.c.b16 %v1275, %v1274
        %v1290 = vpack.c.b16 %v1277, %v1276
        %v1291 = vpack.c.b16 %v1279, %v1278
        %v1292 = vpack.c.b16 %v1281, %v1280
        %v1293 = vpack.c.b16 %v1283, %v1282
        %v1294 = vpack.c.b16 %v1285, %v1284
        %v1295 = vpack.c.b16 %v1287, %v1286
        %1304 = vmatprep.subr.bf16.mxu0 0
        %1305 = vmatpush1.bf16.msra.mxu0 %v1288
        %1306 = vmatprep.subr.bf16.mxu0 0
        %1307 = vmatpush1.bf16.msra.mxu0 %v1289
        %1308 = vmatprep.subr.bf16.mxu0 0
        %1309 = vmatpush1.bf16.msra.mxu0 %v1290
        %1310 = vmatprep.subr.bf16.mxu0 0
        %1311 = vmatpush1.bf16.msra.mxu0 %v1291
        %1312 = vmatprep.subr.bf16.mxu0 0
        %1313 = vmatpush1.bf16.msra.mxu0 %v1292
        %1314 = vmatprep.subr.bf16.mxu0 0
        %1315 = vmatpush1.bf16.msra.mxu0 %v1293
        %1316 = vmatprep.subr.bf16.mxu0 0
        %1317 = vmatpush1.bf16.msra.mxu0 %v1294
        %1318 = vmatprep.subr.bf16.mxu0 0
        %1319 = vmatpush1.bf16.msra.mxu0 %v1295
        %1320 = vmatprep.subr.bf16.mxu0 0
        %1321 = vmatpush1.bf16.msra.mxu0 0
        %1322 = vmatprep.subr.bf16.mxu0 0
        %1323 = vmatpush1.bf16.msra.mxu0 0
        %1324 = vmatprep.subr.bf16.mxu0 0
        %1325 = vmatpush1.bf16.msra.mxu0 0
        %1326 = vmatprep.subr.bf16.mxu0 0
        %1327 = vmatpush1.bf16.msra.mxu0 0
        %1328 = vmatprep.subr.bf16.mxu0 0
        %1329 = vmatpush1.bf16.msra.mxu0 0
        %1330 = vmatprep.subr.bf16.mxu0 0
        %1331 = vmatpush1.bf16.msra.mxu0 0
        %1332 = vmatprep.subr.bf16.mxu0 0
        %1333 = vmatpush1.bf16.msra.mxu0 0
        %1334 = vmatprep.subr.bf16.mxu0 0
        %1335 = vmatpush1.bf16.msra.mxu0 0
        %1336 = vmatprep.mubr.bf16.mxu0 0
        %1337 = vmatmul.mubr.bf16.gmra.mrb[0].mxu0 %v455
        %v1338 = vpop.f32.mrb[0].mxu0
        %v1339 = vadd.f32 0.0, %v1338
        %v1340 = vpop.f32.mrb[0].mxu0
        %v1341 = vpop.f32.mrb[0].mxu0
        %v1342 = vadd.f32 0.0, %v1341
        %v1343 = vpop.f32.mrb[0].mxu0
        %1344 = vmatprep.mubr.bf16.mxu0 0
        %1345 = vmatmul.mubr.bf16.gmra.mrb[0].mxu0 %v456
        %v1346 = vpop.f32.mrb[0].mxu0
        %v1347 = vadd.f32 0.0, %v1346
        %v1348 = vpop.f32.mrb[0].mxu0
        %v1349 = vpop.f32.mrb[0].mxu0
        %v1350 = vadd.f32 0.0, %v1349
        %v1351 = vpop.f32.mrb[0].mxu0
        %1352 = vmatprep.mubr.bf16.mxu0 0
        %1353 = vmatmul.mubr.bf16.gmra.mrb[0].mxu0 %v457
        %v1354 = vpop.f32.mrb[0].mxu0
        %v1355 = vadd.f32 0.0, %v1354
        %v1356 = vpop.f32.mrb[0].mxu0
        %v1357 = vpop.f32.mrb[0].mxu0
        %v1358 = vadd.f32 0.0, %v1357
        %v1359 = vpop.f32.mrb[0].mxu0
        %1360 = vmatprep.mubr.bf16.mxu0 0
        %1361 = vmatmul.mubr.bf16.gmra.mrb[0].mxu0 %v458
        %v1362 = vpop.f32.mrb[0].mxu0
        %v1363 = vadd.f32 0.0, %v1362
        %v1364 = vpop.f32.mrb[0].mxu0
        %v1365 = vpop.f32.mrb[0].mxu0
        %v1366 = vadd.f32 0.0, %v1365
        %v1367 = vpop.f32.mrb[0].mxu0
        %1368 = vmatprep.mubr.bf16.mxu0 0
        %1369 = vmatmul.mubr.bf16.gmra.mrb[0].mxu0 %v459
        %v1370 = vpop.f32.mrb[0].mxu0
        %v1371 = vadd.f32 0.0, %v1370
        %v1372 = vpop.f32.mrb[0].mxu0
        %v1373 = vpop.f32.mrb[0].mxu0
        %v1374 = vadd.f32 0.0, %v1373
        %v1375 = vpop.f32.mrb[0].mxu0
        %1376 = vmatprep.mubr.bf16.mxu0 0
        %1377 = vmatmul.mubr.bf16.gmra.mrb[0].mxu0 %v460
        %v1378 = vpop.f32.mrb[0].mxu0
        %v1379 = vadd.f32 0.0, %v1378
        %v1380 = vpop.f32.mrb[0].mxu0
        %v1381 = vpop.f32.mrb[0].mxu0
        %v1382 = vadd.f32 0.0, %v1381
        %v1383 = vpop.f32.mrb[0].mxu0
        %1384 = vmatprep.mubr.bf16.mxu0 0
        %1385 = vmatmul.mubr.bf16.gmra.mrb[0].mxu0 %v461
        %v1386 = vpop.f32.mrb[0].mxu0
        %v1387 = vadd.f32 0.0, %v1386
        %v1388 = vpop.f32.mrb[0].mxu0
        %v1389 = vpop.f32.mrb[0].mxu0
        %v1390 = vadd.f32 0.0, %v1389
        %v1391 = vpop.f32.mrb[0].mxu0
        %1392 = vmatprep.mubr.bf16.mxu0 0
        %1393 = vmatmul.mubr.bf16.gmra.mrb[0].mxu0 %v462
        %v1394 = vpop.f32.mrb[0].mxu0
        %v1395 = vadd.f32 0.0, %v1394
        %v1396 = vpop.f32.mrb[0].mxu0
        %v1397 = vpop.f32.mrb[0].mxu0
        %v1398 = vadd.f32 0.0, %v1397
        %v1399 = vpop.f32.mrb[0].mxu0
        %1400 = vdwg.mxu0
        %v1401 = vrot.slane %v1339, 4
        %v1402 = vrot.slane %v1342, 4
        %v1403 = vrot.slane %v1347, 4
        %v1404 = vrot.slane %v1350, 4
        %v1405 = vrot.slane %v1355, 4
        %v1406 = vrot.slane %v1358, 4
        %v1407 = vrot.slane %v1363, 4
        %v1408 = vrot.slane %v1366, 4
        %v1409 = vrot.slane %v1371, 4
        %v1410 = vrot.slane %v1374, 4
        %v1411 = vrot.slane %v1379, 4
        %v1412 = vrot.slane %v1382, 4
        %v1413 = vrot.slane %v1387, 4
        %v1414 = vrot.slane %v1390, 4
        %v1415 = vrot.slane %v1395, 4
        %v1416 = vrot.slane %v1398, 4
        %vm1417 = vcmp.lt.s32.totalorder %v657, 4
        %v1418 = vsel %vm1417, %v1415, %v1416
        %v1419 = vsel %vm1417, %v1414, %v1415
        %v1420 = vsel %vm1417, %v1413, %v1414
        %v1421 = vsel %vm1417, %v1412, %v1413
        %v1422 = vsel %vm1417, %v1411, %v1412
        %v1423 = vsel %vm1417, %v1410, %v1411
        %v1424 = vsel %vm1417, %v1409, %v1410
        %v1425 = vsel %vm1417, %v1408, %v1409
        %v1426 = vsel %vm1417, %v1407, %v1408
        %v1427 = vsel %vm1417, %v1406, %v1407
        %v1428 = vsel %vm1417, %v1405, %v1406
        %v1429 = vsel %vm1417, %v1404, %v1405
        %v1430 = vsel %vm1417, %v1403, %v1404
        %v1431 = vsel %vm1417, %v1402, %v1403
        %v1432 = vsel %vm1417, %v1401, %v1402
        %v1433 = vsel %vm1417, %v1416, %v1401
        %v1434 = vadd.f32 %v1224, %v1432
        %v1435 = vadd.f32 %v1225, %v1431
        %v1436 = vadd.f32 %v1226, %v1430
        %v1437 = vadd.f32 %v1227, %v1429
        %v1438 = vadd.f32 %v1228, %v1428
        %v1439 = vadd.f32 %v1229, %v1427
        %v1440 = vadd.f32 %v1230, %v1426
        %v1441 = vadd.f32 %v1231, %v1425
        %v1442 = vadd.f32 %v1232, %v1424
        %v1443 = vadd.f32 %v1233, %v1423
        %v1444 = vadd.f32 %v1234, %v1422
        %v1445 = vadd.f32 %v1235, %v1421
        %v1446 = vadd.f32 %v1236, %v1420
        %v1447 = vadd.f32 %v1237, %v1419
        %v1448 = vadd.f32 %v1238, %v1418
        %v1449 = vadd.f32 %v1239, %v1433
        %v1450 = vld [vmem:[#allocation5 + $0x140] sm:$0xf]
        %v1451 = vld [vmem:[#allocation5 + $0x144] sm:$0xf]
        %v1452 = vld [vmem:[#allocation5 + $0x148] sm:$0xf]
        %v1453 = vld [vmem:[#allocation5 + $0x14c] sm:$0xf]
        %v1454 = vld [vmem:[#allocation5 + $0x150] sm:$0xf]
        %v1455 = vld [vmem:[#allocation5 + $0x154] sm:$0xf]
        %v1456 = vld [vmem:[#allocation5 + $0x158] sm:$0xf]
        %v1457 = vld [vmem:[#allocation5 + $0x15c] sm:$0xf]
        %v1458 = vld [vmem:[#allocation5 + $0x160] sm:$0xf]
        %v1459 = vld [vmem:[#allocation5 + $0x164] sm:$0xf]
        %v1460 = vld [vmem:[#allocation5 + $0x168] sm:$0xf]
        %v1461 = vld [vmem:[#allocation5 + $0x16c] sm:$0xf]
        %v1462 = vld [vmem:[#allocation5 + $0x170] sm:$0xf]
        %v1463 = vld [vmem:[#allocation5 + $0x174] sm:$0xf]
        %v1464 = vld [vmem:[#allocation5 + $0x178] sm:$0xf]
        %v1465 = vld [vmem:[#allocation5 + $0x17c] sm:$0xf]
        %v1482 = vunpack.c.l.b16 %v1450
        %v1483 = vunpack.c.l.b16 %v1451
        %v1484 = vunpack.c.l.b16 %v1452
        %v1485 = vunpack.c.l.b16 %v1453
        %v1486 = vunpack.c.l.b16 %v1454
        %v1487 = vunpack.c.l.b16 %v1455
        %v1488 = vunpack.c.l.b16 %v1456
        %v1489 = vunpack.c.l.b16 %v1457
        %v1490 = vunpack.c.l.b16 %v1458
        %v1491 = vunpack.c.l.b16 %v1459
        %v1492 = vunpack.c.l.b16 %v1460
        %v1493 = vunpack.c.l.b16 %v1461
        %v1494 = vunpack.c.l.b16 %v1462
        %v1495 = vunpack.c.l.b16 %v1463
        %v1496 = vunpack.c.l.b16 %v1464
        %v1497 = vunpack.c.l.b16 %v1465
        %v1498 = vpack.c.b16 %v1483, %v1482
        %v1499 = vpack.c.b16 %v1485, %v1484
        %v1500 = vpack.c.b16 %v1487, %v1486
        %v1501 = vpack.c.b16 %v1489, %v1488
        %v1502 = vpack.c.b16 %v1491, %v1490
        %v1503 = vpack.c.b16 %v1493, %v1492
        %v1504 = vpack.c.b16 %v1495, %v1494
        %v1505 = vpack.c.b16 %v1497, %v1496
        %1514 = vmatprep.subr.bf16.mxu0 0
        %1515 = vmatpush1.bf16.msra.mxu0 %v1498
        %1516 = vmatprep.subr.bf16.mxu0 0
        %1517 = vmatpush1.bf16.msra.mxu0 %v1499
        %1518 = vmatprep.subr.bf16.mxu0 0
        %1519 = vmatpush1.bf16.msra.mxu0 %v1500
        %1520 = vmatprep.subr.bf16.mxu0 0
        %1521 = vmatpush1.bf16.msra.mxu0 %v1501
        %1522 = vmatprep.subr.bf16.mxu0 0
        %1523 = vmatpush1.bf16.msra.mxu0 %v1502
        %1524 = vmatprep.subr.bf16.mxu0 0
        %1525 = vmatpush1.bf16.msra.mxu0 %v1503
        %1526 = vmatprep.subr.bf16.mxu0 0
        %1527 = vmatpush1.bf16.msra.mxu0 %v1504
        %1528 = vmatprep.subr.bf16.mxu0 0
        %1529 = vmatpush1.bf16.msra.mxu0 %v1505
        %1530 = vmatprep.subr.bf16.mxu0 0
        %1531 = vmatpush1.bf16.msra.mxu0 0
        %1532 = vmatprep.subr.bf16.mxu0 0
        %1533 = vmatpush1.bf16.msra.mxu0 0
        %1534 = vmatprep.subr.bf16.mxu0 0
        %1535 = vmatpush1.bf16.msra.mxu0 0
        %1536 = vmatprep.subr.bf16.mxu0 0
        %1537 = vmatpush1.bf16.msra.mxu0 0
        %1538 = vmatprep.subr.bf16.mxu0 0
        %1539 = vmatpush1.bf16.msra.mxu0 0
        %1540 = vmatprep.subr.bf16.mxu0 0
        %1541 = vmatpush1.bf16.msra.mxu0 0
        %1542 = vmatprep.subr.bf16.mxu0 0
        %1543 = vmatpush1.bf16.msra.mxu0 0
        %1544 = vmatprep.subr.bf16.mxu0 0
        %1545 = vmatpush1.bf16.msra.mxu0 0
        %1546 = vmatprep.mubr.bf16.mxu0 0
        %1547 = vmatmul.mubr.bf16.gmra.mrb[0].mxu0 %v455
        %v1548 = vpop.f32.mrb[0].mxu0
        %v1549 = vadd.f32 0.0, %v1548
        %v1550 = vpop.f32.mrb[0].mxu0
        %v1551 = vpop.f32.mrb[0].mxu0
        %v1552 = vadd.f32 0.0, %v1551
        %v1553 = vpop.f32.mrb[0].mxu0
        %1554 = vmatprep.mubr.bf16.mxu0 0
        %1555 = vmatmul.mubr.bf16.gmra.mrb[0].mxu0 %v456
        %v1556 = vpop.f32.mrb[0].mxu0
        %v1557 = vadd.f32 0.0, %v1556
        %v1558 = vpop.f32.mrb[0].mxu0
        %v1559 = vpop.f32.mrb[0].mxu0
        %v1560 = vadd.f32 0.0, %v1559
        %v1561 = vpop.f32.mrb[0].mxu0
        %1562 = vmatprep.mubr.bf16.mxu0 0
        %1563 = vmatmul.mubr.bf16.gmra.mrb[0].mxu0 %v457
        %v1564 = vpop.f32.mrb[0].mxu0
        %v1565 = vadd.f32 0.0, %v1564
        %v1566 = vpop.f32.mrb[0].mxu0
        %v1567 = vpop.f32.mrb[0].mxu0
        %v1568 = vadd.f32 0.0, %v1567
        %v1569 = vpop.f32.mrb[0].mxu0
        %1570 = vmatprep.mubr.bf16.mxu0 0
        %1571 = vmatmul.mubr.bf16.gmra.mrb[0].mxu0 %v458
        %v1572 = vpop.f32.mrb[0].mxu0
        %v1573 = vadd.f32 0.0, %v1572
        %v1574 = vpop.f32.mrb[0].mxu0
        %v1575 = vpop.f32.mrb[0].mxu0
        %v1576 = vadd.f32 0.0, %v1575
        %v1577 = vpop.f32.mrb[0].mxu0
        %1578 = vmatprep.mubr.bf16.mxu0 0
        %1579 = vmatmul.mubr.bf16.gmra.mrb[0].mxu0 %v459
        %v1580 = vpop.f32.mrb[0].mxu0
        %v1581 = vadd.f32 0.0, %v1580
        %v1582 = vpop.f32.mrb[0].mxu0
        %v1583 = vpop.f32.mrb[0].mxu0
        %v1584 = vadd.f32 0.0, %v1583
        %v1585 = vpop.f32.mrb[0].mxu0
        %1586 = vmatprep.mubr.bf16.mxu0 0
        %1587 = vmatmul.mubr.bf16.gmra.mrb[0].mxu0 %v460
        %v1588 = vpop.f32.mrb[0].mxu0
        %v1589 = vadd.f32 0.0, %v1588
        %v1590 = vpop.f32.mrb[0].mxu0
        %v1591 = vpop.f32.mrb[0].mxu0
        %v1592 = vadd.f32 0.0, %v1591
        %v1593 = vpop.f32.mrb[0].mxu0
        %1594 = vmatprep.mubr.bf16.mxu0 0
        %1595 = vmatmul.mubr.bf16.gmra.mrb[0].mxu0 %v461
        %v1596 = vpop.f32.mrb[0].mxu0
        %v1597 = vadd.f32 0.0, %v1596
        %v1598 = vpop.f32.mrb[0].mxu0
        %v1599 = vpop.f32.mrb[0].mxu0
        %v1600 = vadd.f32 0.0, %v1599
        %v1601 = vpop.f32.mrb[0].mxu0
        %1602 = vmatprep.mubr.bf16.mxu0 0
        %1603 = vmatmul.mubr.bf16.gmra.mrb[0].mxu0 %v462
        %v1604 = vpop.f32.mrb[0].mxu0
        %v1605 = vadd.f32 0.0, %v1604
        %v1606 = vpop.f32.mrb[0].mxu0
        %v1607 = vpop.f32.mrb[0].mxu0
        %v1608 = vadd.f32 0.0, %v1607
        %v1609 = vpop.f32.mrb[0].mxu0
        %1610 = vdwg.mxu0
        %v1611 = vrot.slane %v1549, 5
        %v1612 = vrot.slane %v1552, 5
        %v1613 = vrot.slane %v1557, 5
        %v1614 = vrot.slane %v1560, 5
        %v1615 = vrot.slane %v1565, 5
        %v1616 = vrot.slane %v1568, 5
        %v1617 = vrot.slane %v1573, 5
        %v1618 = vrot.slane %v1576, 5
        %v1619 = vrot.slane %v1581, 5
        %v1620 = vrot.slane %v1584, 5
        %v1621 = vrot.slane %v1589, 5
        %v1622 = vrot.slane %v1592, 5
        %v1623 = vrot.slane %v1597, 5
        %v1624 = vrot.slane %v1600, 5
        %v1625 = vrot.slane %v1605, 5
        %v1626 = vrot.slane %v1608, 5
        %vm1627 = vcmp.lt.s32.totalorder %v657, 3
        %v1628 = vsel %vm1627, %v1625, %v1626
        %v1629 = vsel %vm1627, %v1624, %v1625
        %v1630 = vsel %vm1627, %v1623, %v1624
        %v1631 = vsel %vm1627, %v1622, %v1623
        %v1632 = vsel %vm1627, %v1621, %v1622
        %v1633 = vsel %vm1627, %v1620, %v1621
        %v1634 = vsel %vm1627, %v1619, %v1620
        %v1635 = vsel %vm1627, %v1618, %v1619
        %v1636 = vsel %vm1627, %v1617, %v1618
        %v1637 = vsel %vm1627, %v1616, %v1617
        %v1638 = vsel %vm1627, %v1615, %v1616
        %v1639 = vsel %vm1627, %v1614, %v1615
        %v1640 = vsel %vm1627, %v1613, %v1614
        %v1641 = vsel %vm1627, %v1612, %v1613
        %v1642 = vsel %vm1627, %v1611, %v1612
        %v1643 = vsel %vm1627, %v1626, %v1611
        %v1644 = vadd.f32 %v1434, %v1642
        %v1645 = vadd.f32 %v1435, %v1641
        %v1646 = vadd.f32 %v1436, %v1640
        %v1647 = vadd.f32 %v1437, %v1639
        %v1648 = vadd.f32 %v1438, %v1638
        %v1649 = vadd.f32 %v1439, %v1637
        %v1650 = vadd.f32 %v1440, %v1636
        %v1651 = vadd.f32 %v1441, %v1635
        %v1652 = vadd.f32 %v1442, %v1634
        %v1653 = vadd.f32 %v1443, %v1633
        %v1654 = vadd.f32 %v1444, %v1632
        %v1655 = vadd.f32 %v1445, %v1631
        %v1656 = vadd.f32 %v1446, %v1630
        %v1657 = vadd.f32 %v1447, %v1629
        %v1658 = vadd.f32 %v1448, %v1628
        %v1659 = vadd.f32 %v1449, %v1643
        %v1660 = vld [vmem:[#allocation5 + $0x180] sm:$0xf]
        %v1661 = vld [vmem:[#allocation5 + $0x184] sm:$0xf]
        %v1662 = vld [vmem:[#allocation5 + $0x188] sm:$0xf]
        %v1663 = vld [vmem:[#allocation5 + $0x18c] sm:$0xf]
        %v1664 = vld [vmem:[#allocation5 + $0x190] sm:$0xf]
        %v1665 = vld [vmem:[#allocation5 + $0x194] sm:$0xf]
        %v1666 = vld [vmem:[#allocation5 + $0x198] sm:$0xf]
        %v1667 = vld [vmem:[#allocation5 + $0x19c] sm:$0xf]
        %v1668 = vld [vmem:[#allocation5 + $0x1a0] sm:$0xf]
        %v1669 = vld [vmem:[#allocation5 + $0x1a4] sm:$0xf]
        %v1670 = vld [vmem:[#allocation5 + $0x1a8] sm:$0xf]
        %v1671 = vld [vmem:[#allocation5 + $0x1ac] sm:$0xf]
        %v1672 = vld [vmem:[#allocation5 + $0x1b0] sm:$0xf]
        %v1673 = vld [vmem:[#allocation5 + $0x1b4] sm:$0xf]
        %v1674 = vld [vmem:[#allocation5 + $0x1b8] sm:$0xf]
        %v1675 = vld [vmem:[#allocation5 + $0x1bc] sm:$0xf]
        %v1692 = vunpack.c.l.b16 %v1660
        %v1693 = vunpack.c.l.b16 %v1661
        %v1694 = vunpack.c.l.b16 %v1662
        %v1695 = vunpack.c.l.b16 %v1663
        %v1696 = vunpack.c.l.b16 %v1664
        %v1697 = vunpack.c.l.b16 %v1665
        %v1698 = vunpack.c.l.b16 %v1666
        %v1699 = vunpack.c.l.b16 %v1667
        %v1700 = vunpack.c.l.b16 %v1668
        %v1701 = vunpack.c.l.b16 %v1669
        %v1702 = vunpack.c.l.b16 %v1670
        %v1703 = vunpack.c.l.b16 %v1671
        %v1704 = vunpack.c.l.b16 %v1672
        %v1705 = vunpack.c.l.b16 %v1673
        %v1706 = vunpack.c.l.b16 %v1674
        %v1707 = vunpack.c.l.b16 %v1675
        %v1708 = vpack.c.b16 %v1693, %v1692
        %v1709 = vpack.c.b16 %v1695, %v1694
        %v1710 = vpack.c.b16 %v1697, %v1696
        %v1711 = vpack.c.b16 %v1699, %v1698
        %v1712 = vpack.c.b16 %v1701, %v1700
        %v1713 = vpack.c.b16 %v1703, %v1702
        %v1714 = vpack.c.b16 %v1705, %v1704
        %v1715 = vpack.c.b16 %v1707, %v1706
        %1724 = vmatprep.subr.bf16.mxu0 0
        %1725 = vmatpush1.bf16.msra.mxu0 %v1708
        %1726 = vmatprep.subr.bf16.mxu0 0
        %1727 = vmatpush1.bf16.msra.mxu0 %v1709
        %1728 = vmatprep.subr.bf16.mxu0 0
        %1729 = vmatpush1.bf16.msra.mxu0 %v1710
        %1730 = vmatprep.subr.bf16.mxu0 0
        %1731 = vmatpush1.bf16.msra.mxu0 %v1711
        %1732 = vmatprep.subr.bf16.mxu0 0
        %1733 = vmatpush1.bf16.msra.mxu0 %v1712
        %1734 = vmatprep.subr.bf16.mxu0 0
        %1735 = vmatpush1.bf16.msra.mxu0 %v1713
        %1736 = vmatprep.subr.bf16.mxu0 0
        %1737 = vmatpush1.bf16.msra.mxu0 %v1714
        %1738 = vmatprep.subr.bf16.mxu0 0
        %1739 = vmatpush1.bf16.msra.mxu0 %v1715
        %1740 = vmatprep.subr.bf16.mxu0 0
        %1741 = vmatpush1.bf16.msra.mxu0 0
        %1742 = vmatprep.subr.bf16.mxu0 0
        %1743 = vmatpush1.bf16.msra.mxu0 0
        %1744 = vmatprep.subr.bf16.mxu0 0
        %1745 = vmatpush1.bf16.msra.mxu0 0
        %1746 = vmatprep.subr.bf16.mxu0 0
        %1747 = vmatpush1.bf16.msra.mxu0 0
        %1748 = vmatprep.subr.bf16.mxu0 0
        %1749 = vmatpush1.bf16.msra.mxu0 0
        %1750 = vmatprep.subr.bf16.mxu0 0
        %1751 = vmatpush1.bf16.msra.mxu0 0
        %1752 = vmatprep.subr.bf16.mxu0 0
        %1753 = vmatpush1.bf16.msra.mxu0 0
        %1754 = vmatprep.subr.bf16.mxu0 0
        %1755 = vmatpush1.bf16.msra.mxu0 0
        %1756 = vmatprep.mubr.bf16.mxu0 0
        %1757 = vmatmul.mubr.bf16.gmra.mrb[0].mxu0 %v455
        %v1758 = vpop.f32.mrb[0].mxu0
        %v1759 = vadd.f32 0.0, %v1758
        %v1760 = vpop.f32.mrb[0].mxu0
        %v1761 = vpop.f32.mrb[0].mxu0
        %v1762 = vadd.f32 0.0, %v1761
        %v1763 = vpop.f32.mrb[0].mxu0
        %1764 = vmatprep.mubr.bf16.mxu0 0
        %1765 = vmatmul.mubr.bf16.gmra.mrb[0].mxu0 %v456
        %v1766 = vpop.f32.mrb[0].mxu0
        %v1767 = vadd.f32 0.0, %v1766
        %v1768 = vpop.f32.mrb[0].mxu0
        %v1769 = vpop.f32.mrb[0].mxu0
        %v1770 = vadd.f32 0.0, %v1769
        %v1771 = vpop.f32.mrb[0].mxu0
        %1772 = vmatprep.mubr.bf16.mxu0 0
        %1773 = vmatmul.mubr.bf16.gmra.mrb[0].mxu0 %v457
        %v1774 = vpop.f32.mrb[0].mxu0
        %v1775 = vadd.f32 0.0, %v1774
        %v1776 = vpop.f32.mrb[0].mxu0
        %v1777 = vpop.f32.mrb[0].mxu0
        %v1778 = vadd.f32 0.0, %v1777
        %v1779 = vpop.f32.mrb[0].mxu0
        %1780 = vmatprep.mubr.bf16.mxu0 0
        %1781 = vmatmul.mubr.bf16.gmra.mrb[0].mxu0 %v458
        %v1782 = vpop.f32.mrb[0].mxu0
        %v1783 = vadd.f32 0.0, %v1782
        %v1784 = vpop.f32.mrb[0].mxu0
        %v1785 = vpop.f32.mrb[0].mxu0
        %v1786 = vadd.f32 0.0, %v1785
        %v1787 = vpop.f32.mrb[0].mxu0
        %1788 = vmatprep.mubr.bf16.mxu0 0
        %1789 = vmatmul.mubr.bf16.gmra.mrb[0].mxu0 %v459
        %v1790 = vpop.f32.mrb[0].mxu0
        %v1791 = vadd.f32 0.0, %v1790
        %v1792 = vpop.f32.mrb[0].mxu0
        %v1793 = vpop.f32.mrb[0].mxu0
        %v1794 = vadd.f32 0.0, %v1793
        %v1795 = vpop.f32.mrb[0].mxu0
        %1796 = vmatprep.mubr.bf16.mxu0 0
        %1797 = vmatmul.mubr.bf16.gmra.mrb[0].mxu0 %v460
        %v1798 = vpop.f32.mrb[0].mxu0
        %v1799 = vadd.f32 0.0, %v1798
        %v1800 = vpop.f32.mrb[0].mxu0
        %v1801 = vpop.f32.mrb[0].mxu0
        %v1802 = vadd.f32 0.0, %v1801
        %v1803 = vpop.f32.mrb[0].mxu0
        %1804 = vmatprep.mubr.bf16.mxu0 0
        %1805 = vmatmul.mubr.bf16.gmra.mrb[0].mxu0 %v461
        %v1806 = vpop.f32.mrb[0].mxu0
        %v1807 = vadd.f32 0.0, %v1806
        %v1808 = vpop.f32.mrb[0].mxu0
        %v1809 = vpop.f32.mrb[0].mxu0
        %v1810 = vadd.f32 0.0, %v1809
        %v1811 = vpop.f32.mrb[0].mxu0
        %1812 = vmatprep.mubr.bf16.mxu0 0
        %1813 = vmatmul.mubr.bf16.gmra.mrb[0].mxu0 %v462
        %v1814 = vpop.f32.mrb[0].mxu0
        %v1815 = vadd.f32 0.0, %v1814
        %v1816 = vpop.f32.mrb[0].mxu0
        %v1817 = vpop.f32.mrb[0].mxu0
        %v1818 = vadd.f32 0.0, %v1817
        %v1819 = vpop.f32.mrb[0].mxu0
        %1820 = vdwg.mxu0
        %v1821 = vrot.slane %v1759, 6
        %v1822 = vrot.slane %v1762, 6
        %v1823 = vrot.slane %v1767, 6
        %v1824 = vrot.slane %v1770, 6
        %v1825 = vrot.slane %v1775, 6
        %v1826 = vrot.slane %v1778, 6
        %v1827 = vrot.slane %v1783, 6
        %v1828 = vrot.slane %v1786, 6
        %v1829 = vrot.slane %v1791, 6
        %v1830 = vrot.slane %v1794, 6
        %v1831 = vrot.slane %v1799, 6
        %v1832 = vrot.slane %v1802, 6
        %v1833 = vrot.slane %v1807, 6
        %v1834 = vrot.slane %v1810, 6
        %v1835 = vrot.slane %v1815, 6
        %v1836 = vrot.slane %v1818, 6
        %vm1837 = vcmp.lt.s32.totalorder %v657, 2
        %v1838 = vsel %vm1837, %v1835, %v1836
        %v1839 = vsel %vm1837, %v1834, %v1835
        %v1840 = vsel %vm1837, %v1833, %v1834
        %v1841 = vsel %vm1837, %v1832, %v1833
        %v1842 = vsel %vm1837, %v1831, %v1832
        %v1843 = vsel %vm1837, %v1830, %v1831
        %v1844 = vsel %vm1837, %v1829, %v1830
        %v1845 = vsel %vm1837, %v1828, %v1829
        %v1846 = vsel %vm1837, %v1827, %v1828
        %v1847 = vsel %vm1837, %v1826, %v1827
        %v1848 = vsel %vm1837, %v1825, %v1826
        %v1849 = vsel %vm1837, %v1824, %v1825
        %v1850 = vsel %vm1837, %v1823, %v1824
        %v1851 = vsel %vm1837, %v1822, %v1823
        %v1852 = vsel %vm1837, %v1821, %v1822
        %v1853 = vsel %vm1837, %v1836, %v1821
        %v1854 = vadd.f32 %v1644, %v1852
        %v1855 = vadd.f32 %v1645, %v1851
        %v1856 = vadd.f32 %v1646, %v1850
        %v1857 = vadd.f32 %v1647, %v1849
        %v1858 = vadd.f32 %v1648, %v1848
        %v1859 = vadd.f32 %v1649, %v1847
        %v1860 = vadd.f32 %v1650, %v1846
        %v1861 = vadd.f32 %v1651, %v1845
        %v1862 = vadd.f32 %v1652, %v1844
        %v1863 = vadd.f32 %v1653, %v1843
        %v1864 = vadd.f32 %v1654, %v1842
        %v1865 = vadd.f32 %v1655, %v1841
        %v1866 = vadd.f32 %v1656, %v1840
        %v1867 = vadd.f32 %v1657, %v1839
        %v1868 = vadd.f32 %v1658, %v1838
        %v1869 = vadd.f32 %v1659, %v1853
        %v1870 = vld [vmem:[%s2] sm:$0x1]
        %v1872 = vlaneseq
        %v1873 = vshrl.u32 %v1872, 7
        %v1874 = vsub.s32 0, %v1873
        %v1875 = vrot.slane %v1870, %v1874
        %v1877 = vadd.f32 %v1854, %v1875
        %v1878 = vadd.f32 %v1855, %v1875
        %v1879 = vadd.f32 %v1856, %v1875
        %v1880 = vadd.f32 %v1857, %v1875
        %v1881 = vadd.f32 %v1858, %v1875
        %v1882 = vadd.f32 %v1859, %v1875
        %v1883 = vadd.f32 %v1860, %v1875
        %v1884 = vadd.f32 %v1861, %v1875
        %v1885 = vadd.f32 %v1862, %v1875
        %v1886 = vadd.f32 %v1863, %v1875
        %v1887 = vadd.f32 %v1864, %v1875
        %v1888 = vadd.f32 %v1865, %v1875
        %v1889 = vadd.f32 %v1866, %v1875
        %v1890 = vadd.f32 %v1867, %v1875
        %v1891 = vadd.f32 %v1868, %v1875
        %v1892 = vadd.f32 %v1869, %v1875
        %v1893 = vmax.f32 %v1877, 0.0
        %v1894 = vmax.f32 %v1878, 0.0
        %v1895 = vmax.f32 %v1879, 0.0
        %v1896 = vmax.f32 %v1880, 0.0
        %v1897 = vmax.f32 %v1881, 0.0
        %v1898 = vmax.f32 %v1882, 0.0
        %v1899 = vmax.f32 %v1883, 0.0
        %v1900 = vmax.f32 %v1884, 0.0
        %v1901 = vmax.f32 %v1885, 0.0
        %v1902 = vmax.f32 %v1886, 0.0
        %v1903 = vmax.f32 %v1887, 0.0
        %v1904 = vmax.f32 %v1888, 0.0
        %v1905 = vmax.f32 %v1889, 0.0
        %v1906 = vmax.f32 %v1890, 0.0
        %v1907 = vmax.f32 %v1891, 0.0
        %v1908 = vmax.f32 %v1892, 0.0
        %v1909 = vpack.c.bf16 %v1894, %v1893
        %v1910 = vpack.c.bf16 %v1896, %v1895
        %v1911 = vpack.c.bf16 %v1898, %v1897
        %v1912 = vpack.c.bf16 %v1900, %v1899
        %v1913 = vpack.c.bf16 %v1902, %v1901
        %v1914 = vpack.c.bf16 %v1904, %v1903
        %v1915 = vpack.c.bf16 %v1906, %v1905
        %v1916 = vpack.c.bf16 %v1908, %v1907
        %v1917 = vld [vmem:[#allocation7] sm:$0xf]
        %v1918 = vld [vmem:[#allocation7 + $0x4] sm:$0xf]
        %v1919 = vld [vmem:[#allocation7 + $0x8] sm:$0xf]
        %v1920 = vld [vmem:[#allocation7 + $0xc] sm:$0xf]
        %v1921 = vld [vmem:[#allocation7 + $0x10] sm:$0xf]
        %v1922 = vld [vmem:[#allocation7 + $0x14] sm:$0xf]
        %v1923 = vld [vmem:[#allocation7 + $0x18] sm:$0xf]
        %v1924 = vld [vmem:[#allocation7 + $0x1c] sm:$0xf]
        %v1925 = vld [vmem:[#allocation7 + $0x20] sm:$0xf]
        %v1926 = vld [vmem:[#allocation7 + $0x24] sm:$0xf]
        %v1927 = vld [vmem:[#allocation7 + $0x28] sm:$0xf]
        %v1928 = vld [vmem:[#allocation7 + $0x2c] sm:$0xf]
        %v1929 = vld [vmem:[#allocation7 + $0x30] sm:$0xf]
        %v1930 = vld [vmem:[#allocation7 + $0x34] sm:$0xf]
        %v1931 = vld [vmem:[#allocation7 + $0x38] sm:$0xf]
        %v1932 = vld [vmem:[#allocation7 + $0x3c] sm:$0xf]
        %v1933 = vld [vmem:[#allocation7 + $0x40] sm:$0xf]
        %v1934 = vld [vmem:[#allocation7 + $0x44] sm:$0xf]
        %v1935 = vld [vmem:[#allocation7 + $0x48] sm:$0xf]
        %v1936 = vld [vmem:[#allocation7 + $0x4c] sm:$0xf]
        %v1937 = vld [vmem:[#allocation7 + $0x50] sm:$0xf]
        %v1938 = vld [vmem:[#allocation7 + $0x54] sm:$0xf]
        %v1939 = vld [vmem:[#allocation7 + $0x58] sm:$0xf]
        %v1940 = vld [vmem:[#allocation7 + $0x5c] sm:$0xf]
        %v1941 = vld [vmem:[#allocation7 + $0x60] sm:$0xf]
        %v1942 = vld [vmem:[#allocation7 + $0x64] sm:$0xf]
        %v1943 = vld [vmem:[#allocation7 + $0x68] sm:$0xf]
        %v1944 = vld [vmem:[#allocation7 + $0x6c] sm:$0xf]
        %v1945 = vld [vmem:[#allocation7 + $0x70] sm:$0xf]
        %v1946 = vld [vmem:[#allocation7 + $0x74] sm:$0xf]
        %v1947 = vld [vmem:[#allocation7 + $0x78] sm:$0xf]
        %v1948 = vld [vmem:[#allocation7 + $0x7c] sm:$0xf]
        %v1965 = vunpack.c.l.b16 %v1933
        %v1966 = vunpack.c.l.b16 %v1934
        %v1967 = vunpack.c.l.b16 %v1935
        %v1968 = vunpack.c.l.b16 %v1936
        %v1969 = vunpack.c.l.b16 %v1937
        %v1970 = vunpack.c.l.b16 %v1938
        %v1971 = vunpack.c.l.b16 %v1939
        %v1972 = vunpack.c.l.b16 %v1940
        %v1973 = vunpack.c.l.b16 %v1941
        %v1974 = vunpack.c.l.b16 %v1942
        %v1975 = vunpack.c.l.b16 %v1943
        %v1976 = vunpack.c.l.b16 %v1944
        %v1977 = vunpack.c.l.b16 %v1945
        %v1978 = vunpack.c.l.b16 %v1946
        %v1979 = vunpack.c.l.b16 %v1947
        %v1980 = vunpack.c.l.b16 %v1948
        %v1981 = vpack.c.b16 %v1966, %v1965
        %v1982 = vpack.c.b16 %v1968, %v1967
        %v1983 = vpack.c.b16 %v1970, %v1969
        %v1984 = vpack.c.b16 %v1972, %v1971
        %v1985 = vpack.c.b16 %v1974, %v1973
        %v1986 = vpack.c.b16 %v1976, %v1975
        %v1987 = vpack.c.b16 %v1978, %v1977
        %v1988 = vpack.c.b16 %v1980, %v1979
        %1997 = vmatprep.subr.bf16.mxu0 0
        %1998 = vmatpush1.bf16.msra.mxu0 %v1981
        %1999 = vmatprep.subr.bf16.mxu0 0
        %2000 = vmatpush1.bf16.msra.mxu0 %v1982
        %2001 = vmatprep.subr.bf16.mxu0 0
        %2002 = vmatpush1.bf16.msra.mxu0 %v1983
        %2003 = vmatprep.subr.bf16.mxu0 0
        %2004 = vmatpush1.bf16.msra.mxu0 %v1984
        %2005 = vmatprep.subr.bf16.mxu0 0
        %2006 = vmatpush1.bf16.msra.mxu0 %v1985
        %2007 = vmatprep.subr.bf16.mxu0 0
        %2008 = vmatpush1.bf16.msra.mxu0 %v1986
        %2009 = vmatprep.subr.bf16.mxu0 0
        %2010 = vmatpush1.bf16.msra.mxu0 %v1987
        %2011 = vmatprep.subr.bf16.mxu0 0
        %2012 = vmatpush1.bf16.msra.mxu0 %v1988
        %2013 = vmatprep.subr.bf16.mxu0 0
        %2014 = vmatpush1.bf16.msra.mxu0 0
        %2015 = vmatprep.subr.bf16.mxu0 0
        %2016 = vmatpush1.bf16.msra.mxu0 0
        %2017 = vmatprep.subr.bf16.mxu0 0
        %2018 = vmatpush1.bf16.msra.mxu0 0
        %2019 = vmatprep.subr.bf16.mxu0 0
        %2020 = vmatpush1.bf16.msra.mxu0 0
        %2021 = vmatprep.subr.bf16.mxu0 0
        %2022 = vmatpush1.bf16.msra.mxu0 0
        %2023 = vmatprep.subr.bf16.mxu0 0
        %2024 = vmatpush1.bf16.msra.mxu0 0
        %2025 = vmatprep.subr.bf16.mxu0 0
        %2026 = vmatpush1.bf16.msra.mxu0 0
        %2027 = vmatprep.subr.bf16.mxu0 0
        %2028 = vmatpush1.bf16.msra.mxu0 0
        %2029 = vmatprep.mubr.bf16.mxu0 0
        %2030 = vmatmul.mubr.bf16.gmra.mrb[0].mxu0 %v1909
        %v2031 = vpop.f32.mrb[0].mxu0
        %v2032 = vadd.f32 0.0, %v2031
        %v2033 = vpop.f32.mrb[0].mxu0
        %v2034 = vpop.f32.mrb[0].mxu0
        %v2035 = vadd.f32 0.0, %v2034
        %v2036 = vpop.f32.mrb[0].mxu0
        %2037 = vmatprep.mubr.bf16.mxu0 0
        %2038 = vmatmul.mubr.bf16.gmra.mrb[0].mxu0 %v1910
        %v2039 = vpop.f32.mrb[0].mxu0
        %v2040 = vadd.f32 0.0, %v2039
        %v2041 = vpop.f32.mrb[0].mxu0
        %v2042 = vpop.f32.mrb[0].mxu0
        %v2043 = vadd.f32 0.0, %v2042
        %v2044 = vpop.f32.mrb[0].mxu0
        %2045 = vmatprep.mubr.bf16.mxu0 0
        %2046 = vmatmul.mubr.bf16.gmra.mrb[0].mxu0 %v1911
        %v2047 = vpop.f32.mrb[0].mxu0
        %v2048 = vadd.f32 0.0, %v2047
        %v2049 = vpop.f32.mrb[0].mxu0
        %v2050 = vpop.f32.mrb[0].mxu0
        %v2051 = vadd.f32 0.0, %v2050
        %v2052 = vpop.f32.mrb[0].mxu0
        %2053 = vmatprep.mubr.bf16.mxu0 0
        %2054 = vmatmul.mubr.bf16.gmra.mrb[0].mxu0 %v1912
        %v2055 = vpop.f32.mrb[0].mxu0
        %v2056 = vadd.f32 0.0, %v2055
        %v2057 = vpop.f32.mrb[0].mxu0
        %v2058 = vpop.f32.mrb[0].mxu0
        %v2059 = vadd.f32 0.0, %v2058
        %v2060 = vpop.f32.mrb[0].mxu0
        %2061 = vmatprep.mubr.bf16.mxu0 0
        %2062 = vmatmul.mubr.bf16.gmra.mrb[0].mxu0 %v1913
        %v2063 = vpop.f32.mrb[0].mxu0
        %v2064 = vadd.f32 0.0, %v2063
        %v2065 = vpop.f32.mrb[0].mxu0
        %v2066 = vpop.f32.mrb[0].mxu0
        %v2067 = vadd.f32 0.0, %v2066
        %v2068 = vpop.f32.mrb[0].mxu0
        %2069 = vmatprep.mubr.bf16.mxu0 0
        %2070 = vmatmul.mubr.bf16.gmra.mrb[0].mxu0 %v1914
        %v2071 = vpop.f32.mrb[0].mxu0
        %v2072 = vadd.f32 0.0, %v2071
        %v2073 = vpop.f32.mrb[0].mxu0
        %v2074 = vpop.f32.mrb[0].mxu0
        %v2075 = vadd.f32 0.0, %v2074
        %v2076 = vpop.f32.mrb[0].mxu0
        %2077 = vmatprep.mubr.bf16.mxu0 0
        %2078 = vmatmul.mubr.bf16.gmra.mrb[0].mxu0 %v1915
        %v2079 = vpop.f32.mrb[0].mxu0
        %v2080 = vadd.f32 0.0, %v2079
        %v2081 = vpop.f32.mrb[0].mxu0
        %v2082 = vpop.f32.mrb[0].mxu0
        %v2083 = vadd.f32 0.0, %v2082
        %v2084 = vpop.f32.mrb[0].mxu0
        %2085 = vmatprep.mubr.bf16.mxu0 0
        %2086 = vmatmul.mubr.bf16.gmra.mrb[0].mxu0 %v1916
        %v2087 = vpop.f32.mrb[0].mxu0
        %v2088 = vadd.f32 0.0, %v2087
        %v2089 = vpop.f32.mrb[0].mxu0
        %v2090 = vpop.f32.mrb[0].mxu0
        %v2091 = vadd.f32 0.0, %v2090
        %v2092 = vpop.f32.mrb[0].mxu0
        %2093 = vdwg.mxu0
        %v2094 = vrot.slane %v2032, 1
        %v2095 = vrot.slane %v2035, 1
        %v2096 = vrot.slane %v2040, 1
        %v2097 = vrot.slane %v2043, 1
        %v2098 = vrot.slane %v2048, 1
        %v2099 = vrot.slane %v2051, 1
        %v2100 = vrot.slane %v2056, 1
        %v2101 = vrot.slane %v2059, 1
        %v2102 = vrot.slane %v2064, 1
        %v2103 = vrot.slane %v2067, 1
        %v2104 = vrot.slane %v2072, 1
        %v2105 = vrot.slane %v2075, 1
        %v2106 = vrot.slane %v2080, 1
        %v2107 = vrot.slane %v2083, 1
        %v2108 = vrot.slane %v2088, 1
        %v2109 = vrot.slane %v2091, 1
        %v2110 = vsel %vm658, %v2108, %v2109
        %v2111 = vsel %vm658, %v2107, %v2108
        %v2112 = vsel %vm658, %v2106, %v2107
        %v2113 = vsel %vm658, %v2105, %v2106
        %v2114 = vsel %vm658, %v2104, %v2105
        %v2115 = vsel %vm658, %v2103, %v2104
        %v2116 = vsel %vm658, %v2102, %v2103
        %v2117 = vsel %vm658, %v2101, %v2102
        %v2118 = vsel %vm658, %v2100, %v2101
        %v2119 = vsel %vm658, %v2099, %v2100
        %v2120 = vsel %vm658, %v2098, %v2099
        %v2121 = vsel %vm658, %v2097, %v2098
        %v2122 = vsel %vm658, %v2096, %v2097
        %v2123 = vsel %vm658, %v2095, %v2096
        %v2124 = vsel %vm658, %v2094, %v2095
        %v2125 = vsel %vm658, %v2109, %v2094
        %v2142 = vunpack.c.l.b16 %v1917
        %v2143 = vunpack.c.l.b16 %v1918
        %v2144 = vunpack.c.l.b16 %v1919
        %v2145 = vunpack.c.l.b16 %v1920
        %v2146 = vunpack.c.l.b16 %v1921
        %v2147 = vunpack.c.l.b16 %v1922
        %v2148 = vunpack.c.l.b16 %v1923
        %v2149 = vunpack.c.l.b16 %v1924
        %v2150 = vunpack.c.l.b16 %v1925
        %v2151 = vunpack.c.l.b16 %v1926
        %v2152 = vunpack.c.l.b16 %v1927
        %v2153 = vunpack.c.l.b16 %v1928
        %v2154 = vunpack.c.l.b16 %v1929
        %v2155 = vunpack.c.l.b16 %v1930
        %v2156 = vunpack.c.l.b16 %v1931
        %v2157 = vunpack.c.l.b16 %v1932
        %v2158 = vpack.c.b16 %v2143, %v2142
        %v2159 = vpack.c.b16 %v2145, %v2144
        %v2160 = vpack.c.b16 %v2147, %v2146
        %v2161 = vpack.c.b16 %v2149, %v2148
        %v2162 = vpack.c.b16 %v2151, %v2150
        %v2163 = vpack.c.b16 %v2153, %v2152
        %v2164 = vpack.c.b16 %v2155, %v2154
        %v2165 = vpack.c.b16 %v2157, %v2156
        %2174 = vmatprep.subr.bf16.mxu0 0
        %2175 = vmatpush1.bf16.msra.mxu0 %v2158
        %2176 = vmatprep.subr.bf16.mxu0 0
        %2177 = vmatpush1.bf16.msra.mxu0 %v2159
        %2178 = vmatprep.subr.bf16.mxu0 0
        %2179 = vmatpush1.bf16.msra.mxu0 %v2160
        %2180 = vmatprep.subr.bf16.mxu0 0
        %2181 = vmatpush1.bf16.msra.mxu0 %v2161
        %2182 = vmatprep.subr.bf16.mxu0 0
        %2183 = vmatpush1.bf16.msra.mxu0 %v2162
        %2184 = vmatprep.subr.bf16.mxu0 0
        %2185 = vmatpush1.bf16.msra.mxu0 %v2163
        %2186 = vmatprep.subr.bf16.mxu0 0
        %2187 = vmatpush1.bf16.msra.mxu0 %v2164
        %2188 = vmatprep.subr.bf16.mxu0 0
        %2189 = vmatpush1.bf16.msra.mxu0 %v2165
        %2190 = vmatprep.subr.bf16.mxu0 0
        %2191 = vmatpush1.bf16.msra.mxu0 0
        %2192 = vmatprep.subr.bf16.mxu0 0
        %2193 = vmatpush1.bf16.msra.mxu0 0
        %2194 = vmatprep.subr.bf16.mxu0 0
        %2195 = vmatpush1.bf16.msra.mxu0 0
        %2196 = vmatprep.subr.bf16.mxu0 0
        %2197 = vmatpush1.bf16.msra.mxu0 0
        %2198 = vmatprep.subr.bf16.mxu0 0
        %2199 = vmatpush1.bf16.msra.mxu0 0
        %2200 = vmatprep.subr.bf16.mxu0 0
        %2201 = vmatpush1.bf16.msra.mxu0 0
        %2202 = vmatprep.subr.bf16.mxu0 0
        %2203 = vmatpush1.bf16.msra.mxu0 0
        %2204 = vmatprep.subr.bf16.mxu0 0
        %2205 = vmatpush1.bf16.msra.mxu0 0
        %2206 = vmatprep.mubr.bf16.mxu0 0
        %2207 = vmatmul.mubr.bf16.gmra.mrb[0].mxu0 %v1909
        %v2208 = vpop.f32.mrb[0].mxu0
        %v2209 = vadd.f32 %v2124, %v2208
        %v2210 = vpop.f32.mrb[0].mxu0
        %v2211 = vpop.f32.mrb[0].mxu0
        %v2212 = vadd.f32 %v2123, %v2211
        %v2213 = vpop.f32.mrb[0].mxu0
        %2214 = vmatprep.mubr.bf16.mxu0 0
        %2215 = vmatmul.mubr.bf16.gmra.mrb[0].mxu0 %v1910
        %v2216 = vpop.f32.mrb[0].mxu0
        %v2217 = vadd.f32 %v2122, %v2216
        %v2218 = vpop.f32.mrb[0].mxu0
        %v2219 = vpop.f32.mrb[0].mxu0
        %v2220 = vadd.f32 %v2121, %v2219
        %v2221 = vpop.f32.mrb[0].mxu0
        %2222 = vmatprep.mubr.bf16.mxu0 0
        %2223 = vmatmul.mubr.bf16.gmra.mrb[0].mxu0 %v1911
        %v2224 = vpop.f32.mrb[0].mxu0
        %v2225 = vadd.f32 %v2120, %v2224
        %v2226 = vpop.f32.mrb[0].mxu0
        %v2227 = vpop.f32.mrb[0].mxu0
        %v2228 = vadd.f32 %v2119, %v2227
        %v2229 = vpop.f32.mrb[0].mxu0
        %2230 = vmatprep.mubr.bf16.mxu0 0
        %2231 = vmatmul.mubr.bf16.gmra.mrb[0].mxu0 %v1912
        %v2232 = vpop.f32.mrb[0].mxu0
        %v2233 = vadd.f32 %v2118, %v2232
        %v2234 = vpop.f32.mrb[0].mxu0
        %v2235 = vpop.f32.mrb[0].mxu0
        %v2236 = vadd.f32 %v2117, %v2235
        %v2237 = vpop.f32.mrb[0].mxu0
        %2238 = vmatprep.mubr.bf16.mxu0 0
        %2239 = vmatmul.mubr.bf16.gmra.mrb[0].mxu0 %v1913
        %v2240 = vpop.f32.mrb[0].mxu0
        %v2241 = vadd.f32 %v2116, %v2240
        %v2242 = vpop.f32.mrb[0].mxu0
        %v2243 = vpop.f32.mrb[0].mxu0
        %v2244 = vadd.f32 %v2115, %v2243
        %v2245 = vpop.f32.mrb[0].mxu0
        %2246 = vmatprep.mubr.bf16.mxu0 0
        %2247 = vmatmul.mubr.bf16.gmra.mrb[0].mxu0 %v1914
        %v2248 = vpop.f32.mrb[0].mxu0
        %v2249 = vadd.f32 %v2114, %v2248
        %v2250 = vpop.f32.mrb[0].mxu0
        %v2251 = vpop.f32.mrb[0].mxu0
        %v2252 = vadd.f32 %v2113, %v2251
        %v2253 = vpop.f32.mrb[0].mxu0
        %2254 = vmatprep.mubr.bf16.mxu0 0
        %2255 = vmatmul.mubr.bf16.gmra.mrb[0].mxu0 %v1915
        %v2256 = vpop.f32.mrb[0].mxu0
        %v2257 = vadd.f32 %v2112, %v2256
        %v2258 = vpop.f32.mrb[0].mxu0
        %v2259 = vpop.f32.mrb[0].mxu0
        %v2260 = vadd.f32 %v2111, %v2259
        %v2261 = vpop.f32.mrb[0].mxu0
        %2262 = vmatprep.mubr.bf16.mxu0 0
        %2263 = vmatmul.mubr.bf16.gmra.mrb[0].mxu0 %v1916
        %v2264 = vpop.f32.mrb[0].mxu0
        %v2265 = vadd.f32 %v2110, %v2264
        %v2266 = vpop.f32.mrb[0].mxu0
        %v2267 = vpop.f32.mrb[0].mxu0
        %v2268 = vadd.f32 %v2125, %v2267
        %v2269 = vpop.f32.mrb[0].mxu0
        %2270 = vdwg.mxu0
        %v2271 = vld [vmem:[#allocation7 + $0x80] sm:$0xf]
        %v2272 = vld [vmem:[#allocation7 + $0x84] sm:$0xf]
        %v2273 = vld [vmem:[#allocation7 + $0x88] sm:$0xf]
        %v2274 = vld [vmem:[#allocation7 + $0x8c] sm:$0xf]
        %v2275 = vld [vmem:[#allocation7 + $0x90] sm:$0xf]
        %v2276 = vld [vmem:[#allocation7 + $0x94] sm:$0xf]
        %v2277 = vld [vmem:[#allocation7 + $0x98] sm:$0xf]
        %v2278 = vld [vmem:[#allocation7 + $0x9c] sm:$0xf]
        %v2279 = vld [vmem:[#allocation7 + $0xa0] sm:$0xf]
        %v2280 = vld [vmem:[#allocation7 + $0xa4] sm:$0xf]
        %v2281 = vld [vmem:[#allocation7 + $0xa8] sm:$0xf]
        %v2282 = vld [vmem:[#allocation7 + $0xac] sm:$0xf]
        %v2283 = vld [vmem:[#allocation7 + $0xb0] sm:$0xf]
        %v2284 = vld [vmem:[#allocation7 + $0xb4] sm:$0xf]
        %v2285 = vld [vmem:[#allocation7 + $0xb8] sm:$0xf]
        %v2286 = vld [vmem:[#allocation7 + $0xbc] sm:$0xf]
        %v2303 = vunpack.c.l.b16 %v2271
        %v2304 = vunpack.c.l.b16 %v2272
        %v2305 = vunpack.c.l.b16 %v2273
        %v2306 = vunpack.c.l.b16 %v2274
        %v2307 = vunpack.c.l.b16 %v2275
        %v2308 = vunpack.c.l.b16 %v2276
        %v2309 = vunpack.c.l.b16 %v2277
        %v2310 = vunpack.c.l.b16 %v2278
        %v2311 = vunpack.c.l.b16 %v2279
        %v2312 = vunpack.c.l.b16 %v2280
        %v2313 = vunpack.c.l.b16 %v2281
        %v2314 = vunpack.c.l.b16 %v2282
        %v2315 = vunpack.c.l.b16 %v2283
        %v2316 = vunpack.c.l.b16 %v2284
        %v2317 = vunpack.c.l.b16 %v2285
        %v2318 = vunpack.c.l.b16 %v2286
        %v2319 = vpack.c.b16 %v2304, %v2303
        %v2320 = vpack.c.b16 %v2306, %v2305
        %v2321 = vpack.c.b16 %v2308, %v2307
        %v2322 = vpack.c.b16 %v2310, %v2309
        %v2323 = vpack.c.b16 %v2312, %v2311
        %v2324 = vpack.c.b16 %v2314, %v2313
        %v2325 = vpack.c.b16 %v2316, %v2315
        %v2326 = vpack.c.b16 %v2318, %v2317
        %2335 = vmatprep.subr.bf16.mxu0 0
        %2336 = vmatpush1.bf16.msra.mxu0 %v2319
        %2337 = vmatprep.subr.bf16.mxu0 0
        %2338 = vmatpush1.bf16.msra.mxu0 %v2320
        %2339 = vmatprep.subr.bf16.mxu0 0
        %2340 = vmatpush1.bf16.msra.mxu0 %v2321
        %2341 = vmatprep.subr.bf16.mxu0 0
        %2342 = vmatpush1.bf16.msra.mxu0 %v2322
        %2343 = vmatprep.subr.bf16.mxu0 0
        %2344 = vmatpush1.bf16.msra.mxu0 %v2323
        %2345 = vmatprep.subr.bf16.mxu0 0
        %2346 = vmatpush1.bf16.msra.mxu0 %v2324
        %2347 = vmatprep.subr.bf16.mxu0 0
        %2348 = vmatpush1.bf16.msra.mxu0 %v2325
        %2349 = vmatprep.subr.bf16.mxu0 0
        %2350 = vmatpush1.bf16.msra.mxu0 %v2326
        %2351 = vmatprep.subr.bf16.mxu0 0
        %2352 = vmatpush1.bf16.msra.mxu0 0
        %2353 = vmatprep.subr.bf16.mxu0 0
        %2354 = vmatpush1.bf16.msra.mxu0 0
        %2355 = vmatprep.subr.bf16.mxu0 0
        %2356 = vmatpush1.bf16.msra.mxu0 0
        %2357 = vmatprep.subr.bf16.mxu0 0
        %2358 = vmatpush1.bf16.msra.mxu0 0
        %2359 = vmatprep.subr.bf16.mxu0 0
        %2360 = vmatpush1.bf16.msra.mxu0 0
        %2361 = vmatprep.subr.bf16.mxu0 0
        %2362 = vmatpush1.bf16.msra.mxu0 0
        %2363 = vmatprep.subr.bf16.mxu0 0
        %2364 = vmatpush1.bf16.msra.mxu0 0
        %2365 = vmatprep.subr.bf16.mxu0 0
        %2366 = vmatpush1.bf16.msra.mxu0 0
        %2367 = vmatprep.mubr.bf16.mxu0 0
        %2368 = vmatmul.mubr.bf16.gmra.mrb[0].mxu0 %v1909
        %v2369 = vpop.f32.mrb[0].mxu0
        %v2370 = vadd.f32 0.0, %v2369
        %v2371 = vpop.f32.mrb[0].mxu0
        %v2372 = vpop.f32.mrb[0].mxu0
        %v2373 = vadd.f32 0.0, %v2372
        %v2374 = vpop.f32.mrb[0].mxu0
        %2375 = vmatprep.mubr.bf16.mxu0 0
        %2376 = vmatmul.mubr.bf16.gmra.mrb[0].mxu0 %v1910
        %v2377 = vpop.f32.mrb[0].mxu0
        %v2378 = vadd.f32 0.0, %v2377
        %v2379 = vpop.f32.mrb[0].mxu0
        %v2380 = vpop.f32.mrb[0].mxu0
        %v2381 = vadd.f32 0.0, %v2380
        %v2382 = vpop.f32.mrb[0].mxu0
        %2383 = vmatprep.mubr.bf16.mxu0 0
        %2384 = vmatmul.mubr.bf16.gmra.mrb[0].mxu0 %v1911
        %v2385 = vpop.f32.mrb[0].mxu0
        %v2386 = vadd.f32 0.0, %v2385
        %v2387 = vpop.f32.mrb[0].mxu0
        %v2388 = vpop.f32.mrb[0].mxu0
        %v2389 = vadd.f32 0.0, %v2388
        %v2390 = vpop.f32.mrb[0].mxu0
        %2391 = vmatprep.mubr.bf16.mxu0 0
        %2392 = vmatmul.mubr.bf16.gmra.mrb[0].mxu0 %v1912
        %v2393 = vpop.f32.mrb[0].mxu0
        %v2394 = vadd.f32 0.0, %v2393
        %v2395 = vpop.f32.mrb[0].mxu0
        %v2396 = vpop.f32.mrb[0].mxu0
        %v2397 = vadd.f32 0.0, %v2396
        %v2398 = vpop.f32.mrb[0].mxu0
        %2399 = vmatprep.mubr.bf16.mxu0 0
        %2400 = vmatmul.mubr.bf16.gmra.mrb[0].mxu0 %v1913
        %v2401 = vpop.f32.mrb[0].mxu0
        %v2402 = vadd.f32 0.0, %v2401
        %v2403 = vpop.f32.mrb[0].mxu0
        %v2404 = vpop.f32.mrb[0].mxu0
        %v2405 = vadd.f32 0.0, %v2404
        %v2406 = vpop.f32.mrb[0].mxu0
        %2407 = vmatprep.mubr.bf16.mxu0 0
        %2408 = vmatmul.mubr.bf16.gmra.mrb[0].mxu0 %v1914
        %v2409 = vpop.f32.mrb[0].mxu0
        %v2410 = vadd.f32 0.0, %v2409
        %v2411 = vpop.f32.mrb[0].mxu0
        %v2412 = vpop.f32.mrb[0].mxu0
        %v2413 = vadd.f32 0.0, %v2412
        %v2414 = vpop.f32.mrb[0].mxu0
        %2415 = vmatprep.mubr.bf16.mxu0 0
        %2416 = vmatmul.mubr.bf16.gmra.mrb[0].mxu0 %v1915
        %v2417 = vpop.f32.mrb[0].mxu0
        %v2418 = vadd.f32 0.0, %v2417
        %v2419 = vpop.f32.mrb[0].mxu0
        %v2420 = vpop.f32.mrb[0].mxu0
        %v2421 = vadd.f32 0.0, %v2420
        %v2422 = vpop.f32.mrb[0].mxu0
        %2423 = vmatprep.mubr.bf16.mxu0 0
        %2424 = vmatmul.mubr.bf16.gmra.mrb[0].mxu0 %v1916
        %v2425 = vpop.f32.mrb[0].mxu0
        %v2426 = vadd.f32 0.0, %v2425
        %v2427 = vpop.f32.mrb[0].mxu0
        %v2428 = vpop.f32.mrb[0].mxu0
        %v2429 = vadd.f32 0.0, %v2428
        %v2430 = vpop.f32.mrb[0].mxu0
        %2431 = vdwg.mxu0
        %v2432 = vrot.slane %v2370, 2
        %v2433 = vrot.slane %v2373, 2
        %v2434 = vrot.slane %v2378, 2
        %v2435 = vrot.slane %v2381, 2
        %v2436 = vrot.slane %v2386, 2
        %v2437 = vrot.slane %v2389, 2
        %v2438 = vrot.slane %v2394, 2
        %v2439 = vrot.slane %v2397, 2
        %v2440 = vrot.slane %v2402, 2
        %v2441 = vrot.slane %v2405, 2
        %v2442 = vrot.slane %v2410, 2
        %v2443 = vrot.slane %v2413, 2
        %v2444 = vrot.slane %v2418, 2
        %v2445 = vrot.slane %v2421, 2
        %v2446 = vrot.slane %v2426, 2
        %v2447 = vrot.slane %v2429, 2
        %v2448 = vsel %vm997, %v2446, %v2447
        %v2449 = vsel %vm997, %v2445, %v2446
        %v2450 = vsel %vm997, %v2444, %v2445
        %v2451 = vsel %vm997, %v2443, %v2444
        %v2452 = vsel %vm997, %v2442, %v2443
        %v2453 = vsel %vm997, %v2441, %v2442
        %v2454 = vsel %vm997, %v2440, %v2441
        %v2455 = vsel %vm997, %v2439, %v2440
        %v2456 = vsel %vm997, %v2438, %v2439
        %v2457 = vsel %vm997, %v2437, %v2438
        %v2458 = vsel %vm997, %v2436, %v2437
        %v2459 = vsel %vm997, %v2435, %v2436
        %v2460 = vsel %vm997, %v2434, %v2435
        %v2461 = vsel %vm997, %v2433, %v2434
        %v2462 = vsel %vm997, %v2432, %v2433
        %v2463 = vsel %vm997, %v2447, %v2432
        %v2464 = vadd.f32 %v2209, %v2462
        %v2465 = vadd.f32 %v2212, %v2461
        %v2466 = vadd.f32 %v2217, %v2460
        %v2467 = vadd.f32 %v2220, %v2459
        %v2468 = vadd.f32 %v2225, %v2458
        %v2469 = vadd.f32 %v2228, %v2457
        %v2470 = vadd.f32 %v2233, %v2456
        %v2471 = vadd.f32 %v2236, %v2455
        %v2472 = vadd.f32 %v2241, %v2454
        %v2473 = vadd.f32 %v2244, %v2453
        %v2474 = vadd.f32 %v2249, %v2452
        %v2475 = vadd.f32 %v2252, %v2451
        %v2476 = vadd.f32 %v2257, %v2450
        %v2477 = vadd.f32 %v2260, %v2449
        %v2478 = vadd.f32 %v2265, %v2448
        %v2479 = vadd.f32 %v2268, %v2463
        %v2480 = vld [vmem:[%s4] sm:$0x1]
        %v2482 = vlaneseq
        %v2483 = vshrl.u32 %v2482, 7
        %v2484 = vsub.s32 0, %v2483
        %v2485 = vrot.slane %v2480, %v2484
        %v2487 = vadd.f32 %v2464, %v2485
        %v2488 = vadd.f32 %v2465, %v2485
        %v2489 = vadd.f32 %v2466, %v2485
        %v2490 = vadd.f32 %v2467, %v2485
        %v2491 = vadd.f32 %v2468, %v2485
        %v2492 = vadd.f32 %v2469, %v2485
        %v2493 = vadd.f32 %v2470, %v2485
        %v2494 = vadd.f32 %v2471, %v2485
        %v2495 = vadd.f32 %v2472, %v2485
        %v2496 = vadd.f32 %v2473, %v2485
        %v2497 = vadd.f32 %v2474, %v2485
        %v2498 = vadd.f32 %v2475, %v2485
        %v2499 = vadd.f32 %v2476, %v2485
        %v2500 = vadd.f32 %v2477, %v2485
        %v2501 = vadd.f32 %v2478, %v2485
        %v2502 = vadd.f32 %v2479, %v2485
        %v2503 = vmax.f32 %v2487, 0.0
        %v2504 = vmax.f32 %v2488, 0.0
        %v2505 = vmax.f32 %v2489, 0.0
        %v2506 = vmax.f32 %v2490, 0.0
        %v2507 = vmax.f32 %v2491, 0.0
        %v2508 = vmax.f32 %v2492, 0.0
        %v2509 = vmax.f32 %v2493, 0.0
        %v2510 = vmax.f32 %v2494, 0.0
        %v2511 = vmax.f32 %v2495, 0.0
        %v2512 = vmax.f32 %v2496, 0.0
        %v2513 = vmax.f32 %v2497, 0.0
        %v2514 = vmax.f32 %v2498, 0.0
        %v2515 = vmax.f32 %v2499, 0.0
        %v2516 = vmax.f32 %v2500, 0.0
        %v2517 = vmax.f32 %v2501, 0.0
        %v2518 = vmax.f32 %v2502, 0.0
        %v2519 = vld [vmem:[%s5] sm:$0xf]
        %v2520 = vpack.c.bf16 %v2504, %v2503
        %v2521 = vpack.c.bf16 %v2506, %v2505
        %v2522 = vpack.c.bf16 %v2508, %v2507
        %v2523 = vpack.c.bf16 %v2510, %v2509
        %v2524 = vpack.c.bf16 %v2512, %v2511
        %v2525 = vpack.c.bf16 %v2514, %v2513
        %v2526 = vpack.c.bf16 %v2516, %v2515
        %v2527 = vpack.c.bf16 %v2518, %v2517
        %2528 = vmatprep.subr.bf16.mxu0 0
        %2529 = vmatpush1.bf16.msra.mxu0 %v2520
        %2530 = vmatprep.subr.bf16.mxu0 0
        %2531 = vmatpush1.bf16.msra.mxu0 %v2521
        %2532 = vmatprep.subr.bf16.mxu0 0
        %2533 = vmatpush1.bf16.msra.mxu0 %v2522
        %2534 = vmatprep.subr.bf16.mxu0 0
        %2535 = vmatpush1.bf16.msra.mxu0 %v2523
        %2536 = vmatprep.subr.bf16.mxu0 0
        %2537 = vmatpush1.bf16.msra.mxu0 %v2524
        %2538 = vmatprep.subr.bf16.mxu0 0
        %2539 = vmatpush1.bf16.msra.mxu0 %v2525
        %2540 = vmatprep.subr.bf16.mxu0 0
        %2541 = vmatpush1.bf16.msra.mxu0 %v2526
        %2542 = vmatprep.subr.bf16.mxu0 0
        %2543 = vmatpush1.bf16.msra.mxu0 %v2527
        %2544 = vmatprep.subr.bf16.mxu0 0
        %2545 = vmatpush1.bf16.msra.mxu0 0
        %2546 = vmatprep.subr.bf16.mxu0 0
        %2547 = vmatpush1.bf16.msra.mxu0 0
        %2548 = vmatprep.subr.bf16.mxu0 0
        %2549 = vmatpush1.bf16.msra.mxu0 0
        %2550 = vmatprep.subr.bf16.mxu0 0
        %2551 = vmatpush1.bf16.msra.mxu0 0
        %2552 = vmatprep.subr.bf16.mxu0 0
        %2553 = vmatpush1.bf16.msra.mxu0 0
        %2554 = vmatprep.subr.bf16.mxu0 0
        %2555 = vmatpush1.bf16.msra.mxu0 0
        %2556 = vmatprep.subr.bf16.mxu0 0
        %2557 = vmatpush1.bf16.msra.mxu0 0
        %2558 = vmatprep.subr.bf16.mxu0 0
        %2559 = vmatpush1.bf16.msra.mxu0 0
        %2560 = vmatprep.mubr.bf16.mxu0 0
        %2561 = vmatmul.mubr.bf16.gmra.mrb[0].mxu0 %v2519
        %v2562 = vpop.f32.mrb[0].mxu0
        %v2563 = vadd.f32 0.0, %v2562
        %v2564 = vpop.f32.mrb[0].mxu0
        %v2565 = vpop.f32.mrb[0].mxu0
        %v2566 = vpop.f32.mrb[0].mxu0
        %2567 = vdwg.mxu0
        %v2568 = vpack.c.bf16 %v2563, %v2563
        %v2569 = vld [vmem:[#allocation8] sm:$0xf]
        %v2570 = vld [vmem:[#allocation8 + $0x4] sm:$0xf]
        %v2571 = vld [vmem:[#allocation8 + $0x8] sm:$0xf]
        %v2572 = vld [vmem:[#allocation8 + $0xc] sm:$0xf]
        %v2573 = vld [vmem:[#allocation8 + $0x10] sm:$0xf]
        %v2574 = vld [vmem:[#allocation8 + $0x14] sm:$0xf]
        %v2575 = vld [vmem:[#allocation8 + $0x18] sm:$0xf]
        %v2576 = vld [vmem:[#allocation8 + $0x1c] sm:$0xf]
        %v2577 = vld [vmem:[#allocation8 + $0x20] sm:$0xf]
        %v2578 = vld [vmem:[#allocation8 + $0x24] sm:$0xf]
        %v2579 = vld [vmem:[#allocation8 + $0x28] sm:$0xf]
        %v2580 = vld [vmem:[#allocation8 + $0x2c] sm:$0xf]
        %v2581 = vld [vmem:[#allocation8 + $0x30] sm:$0xf]
        %v2582 = vld [vmem:[#allocation8 + $0x34] sm:$0xf]
        %v2583 = vld [vmem:[#allocation8 + $0x38] sm:$0xf]
        %v2584 = vld [vmem:[#allocation8 + $0x3c] sm:$0xf]
        %v2585 = vld [vmem:[%s7] sm:$0x1]
        %v2587 = vlaneseq
        %v2588 = vshrl.u32 %v2587, 7
        %v2589 = vsub.s32 0, %v2588
        %v2590 = vrot.slane %v2585, %v2589
        %v2608 = vunpack.c.l.b16 %v2569
        %v2609 = vunpack.c.l.b16 %v2570
        %v2610 = vunpack.c.l.b16 %v2571
        %v2611 = vunpack.c.l.b16 %v2572
        %v2612 = vunpack.c.l.b16 %v2573
        %v2613 = vunpack.c.l.b16 %v2574
        %v2614 = vunpack.c.l.b16 %v2575
        %v2615 = vunpack.c.l.b16 %v2576
        %v2616 = vunpack.c.l.b16 %v2577
        %v2617 = vunpack.c.l.b16 %v2578
        %v2618 = vunpack.c.l.b16 %v2579
        %v2619 = vunpack.c.l.b16 %v2580
        %v2620 = vunpack.c.l.b16 %v2581
        %v2621 = vunpack.c.l.b16 %v2582
        %v2622 = vunpack.c.l.b16 %v2583
        %v2623 = vunpack.c.l.b16 %v2584
        %v2624 = vpack.c.b16 %v2609, %v2608
        %v2625 = vpack.c.b16 %v2611, %v2610
        %v2626 = vpack.c.b16 %v2613, %v2612
        %v2627 = vpack.c.b16 %v2615, %v2614
        %v2628 = vpack.c.b16 %v2617, %v2616
        %v2629 = vpack.c.b16 %v2619, %v2618
        %v2630 = vpack.c.b16 %v2621, %v2620
        %v2631 = vpack.c.b16 %v2623, %v2622
        %2640 = vmatprep.subr.bf16.mxu0 0
        %2641 = vmatpush1.bf16.msra.mxu0 %v2624
        %2642 = vmatprep.subr.bf16.mxu0 0
        %2643 = vmatpush1.bf16.msra.mxu0 %v2625
        %2644 = vmatprep.subr.bf16.mxu0 0
        %2645 = vmatpush1.bf16.msra.mxu0 %v2626
        %2646 = vmatprep.subr.bf16.mxu0 0
        %2647 = vmatpush1.bf16.msra.mxu0 %v2627
        %2648 = vmatprep.subr.bf16.mxu0 0
        %2649 = vmatpush1.bf16.msra.mxu0 %v2628
        %2650 = vmatprep.subr.bf16.mxu0 0
        %2651 = vmatpush1.bf16.msra.mxu0 %v2629
        %2652 = vmatprep.subr.bf16.mxu0 0
        %2653 = vmatpush1.bf16.msra.mxu0 %v2630
        %2654 = vmatprep.subr.bf16.mxu0 0
        %2655 = vmatpush1.bf16.msra.mxu0 %v2631
        %2656 = vmatprep.subr.bf16.mxu0 0
        %2657 = vmatpush1.bf16.msra.mxu0 0
        %2658 = vmatprep.subr.bf16.mxu0 0
        %2659 = vmatpush1.bf16.msra.mxu0 0
        %2660 = vmatprep.subr.bf16.mxu0 0
        %2661 = vmatpush1.bf16.msra.mxu0 0
        %2662 = vmatprep.subr.bf16.mxu0 0
        %2663 = vmatpush1.bf16.msra.mxu0 0
        %2664 = vmatprep.subr.bf16.mxu0 0
        %2665 = vmatpush1.bf16.msra.mxu0 0
        %2666 = vmatprep.subr.bf16.mxu0 0
        %2667 = vmatpush1.bf16.msra.mxu0 0
        %2668 = vmatprep.subr.bf16.mxu0 0
        %2669 = vmatpush1.bf16.msra.mxu0 0
        %2670 = vmatprep.subr.bf16.mxu0 0
        %2671 = vmatpush1.bf16.msra.mxu0 0
        %2672 = vmatprep.mubr.bf16.mxu0 0
        %2673 = vmatmul.mubr.bf16.gmra.mrb[0].mxu0 %v2568
        %v2674 = vpop.f32.mrb[0].mxu0
        %v2675 = vadd.f32 %v2590, %v2674
        %v2676 = vpop.f32.mrb[0].mxu0
        %v2677 = vpop.f32.mrb[0].mxu0
        %v2678 = vpop.f32.mrb[0].mxu0
        %2679 = vdwg.mxu0
        %v2680 = vmax.f32 %v2675, 0.0
        %v2681 = vpack.c.bf16 %v2680, %v2680
        %v2682 = vld [vmem:[#allocation10] sm:$0xf]
        %v2683 = vld [vmem:[#allocation10 + $0x4] sm:$0xf]
        %v2684 = vld [vmem:[#allocation10 + $0x8] sm:$0xf]
        %v2685 = vld [vmem:[#allocation10 + $0xc] sm:$0xf]
        %v2686 = vld [vmem:[#allocation10 + $0x10] sm:$0xf]
        %v2687 = vld [vmem:[#allocation10 + $0x14] sm:$0xf]
        %v2688 = vld [vmem:[#allocation10 + $0x18] sm:$0xf]
        %v2689 = vld [vmem:[#allocation10 + $0x1c] sm:$0xf]
        %v2690 = vld [vmem:[#allocation10 + $0x20] sm:$0xf]
        %v2691 = vld [vmem:[#allocation10 + $0x24] sm:$0xf]
        %v2692 = vld [vmem:[#allocation10 + $0x28] sm:$0xf]
        %v2693 = vld [vmem:[#allocation10 + $0x2c] sm:$0xf]
        %v2694 = vld [vmem:[#allocation10 + $0x30] sm:$0xf]
        %v2695 = vld [vmem:[#allocation10 + $0x34] sm:$0xf]
        %v2696 = vld [vmem:[#allocation10 + $0x38] sm:$0xf]
        %v2697 = vld [vmem:[#allocation10 + $0x3c] sm:$0xf]
        %v2698 = vld [vmem:[%s9] sm:$0x1]
        %v2700 = vlaneseq
        %v2701 = vshrl.u32 %v2700, 7
        %v2702 = vsub.s32 0, %v2701
        %v2703 = vrot.slane %v2698, %v2702
        %v2721 = vunpack.c.l.b16 %v2682
        %v2722 = vunpack.c.l.b16 %v2683
        %v2723 = vunpack.c.l.b16 %v2684
        %v2724 = vunpack.c.l.b16 %v2685
        %v2725 = vunpack.c.l.b16 %v2686
        %v2726 = vunpack.c.l.b16 %v2687
        %v2727 = vunpack.c.l.b16 %v2688
        %v2728 = vunpack.c.l.b16 %v2689
        %v2729 = vunpack.c.l.b16 %v2690
        %v2730 = vunpack.c.l.b16 %v2691
        %v2731 = vunpack.c.l.b16 %v2692
        %v2732 = vunpack.c.l.b16 %v2693
        %v2733 = vunpack.c.l.b16 %v2694
        %v2734 = vunpack.c.l.b16 %v2695
        %v2735 = vunpack.c.l.b16 %v2696
        %v2736 = vunpack.c.l.b16 %v2697
        %v2737 = vpack.c.b16 %v2722, %v2721
        %v2738 = vpack.c.b16 %v2724, %v2723
        %v2739 = vpack.c.b16 %v2726, %v2725
        %v2740 = vpack.c.b16 %v2728, %v2727
        %v2741 = vpack.c.b16 %v2730, %v2729
        %v2742 = vpack.c.b16 %v2732, %v2731
        %v2743 = vpack.c.b16 %v2734, %v2733
        %v2744 = vpack.c.b16 %v2736, %v2735
        %2753 = vmatprep.subr.bf16.mxu0 0
        %2754 = vmatpush1.bf16.msra.mxu0 %v2737
        %2755 = vmatprep.subr.bf16.mxu0 0
        %2756 = vmatpush1.bf16.msra.mxu0 %v2738
        %2757 = vmatprep.subr.bf16.mxu0 0
        %2758 = vmatpush1.bf16.msra.mxu0 %v2739
        %2759 = vmatprep.subr.bf16.mxu0 0
        %2760 = vmatpush1.bf16.msra.mxu0 %v2740
        %2761 = vmatprep.subr.bf16.mxu0 0
        %2762 = vmatpush1.bf16.msra.mxu0 %v2741
        %2763 = vmatprep.subr.bf16.mxu0 0
        %2764 = vmatpush1.bf16.msra.mxu0 %v2742
        %2765 = vmatprep.subr.bf16.mxu0 0
        %2766 = vmatpush1.bf16.msra.mxu0 %v2743
        %2767 = vmatprep.subr.bf16.mxu0 0
        %2768 = vmatpush1.bf16.msra.mxu0 %v2744
        %2769 = vmatprep.subr.bf16.mxu0 0
        %2770 = vmatpush1.bf16.msra.mxu0 0
        %2771 = vmatprep.subr.bf16.mxu0 0
        %2772 = vmatpush1.bf16.msra.mxu0 0
        %2773 = vmatprep.subr.bf16.mxu0 0
        %2774 = vmatpush1.bf16.msra.mxu0 0
        %2775 = vmatprep.subr.bf16.mxu0 0
        %2776 = vmatpush1.bf16.msra.mxu0 0
        %2777 = vmatprep.subr.bf16.mxu0 0
        %2778 = vmatpush1.bf16.msra.mxu0 0
        %2779 = vmatprep.subr.bf16.mxu0 0
        %2780 = vmatpush1.bf16.msra.mxu0 0
        %2781 = vmatprep.subr.bf16.mxu0 0
        %2782 = vmatpush1.bf16.msra.mxu0 0
        %2783 = vmatprep.subr.bf16.mxu0 0
        %2784 = vmatpush1.bf16.msra.mxu0 0
        %2785 = vmatprep.mubr.bf16.mxu0 0
        %2786 = vmatmul.mubr.bf16.gmra.mrb[0].mxu0 %v2681
        %v2787 = vpop.f32.mrb[0].mxu0
        %v2788 = vadd.f32 %v2703, %v2787
        %v2789 = vpop.f32.mrb[0].mxu0
        %v2790 = vpop.f32.mrb[0].mxu0
        %v2791 = vpop.f32.mrb[0].mxu0
        %2792 = vdwg.mxu0
        %2793 = vst [vmem:[%s436] sm:$0xff] %v2788
        %s2794 = sand.u32 %s252, 1
        %s2795 = scalar_lea.sflag [#allocation4], %s2794
        %s2796 = sand.u32 %s252, 1
        %s2797 = smul.addr %s2796, 8
        %s2798 = scalar_lea.vmem [#allocation11], %s2797
        // Predicated region
        $region81: #{tpu_custom_call.1} parent=59 // pred_check
          %p2799 = pneg %p262
        $region82: #{tpu_custom_call.1} parent=59 // pred_check_branch
          %2801 = sbr.rel (%p2799) target = $region84
        $region83: #{tpu_custom_call.1} parent=59 // pred_region
          %s2803 = ssub.s32 128, 128
          %2804 = vsyncadd %s2795, %s2803
          %s2805 = smul.addr %s29, 128
          %s2806 = scalar_lea.hbm %s10, %s2805
          %s2808 = sshll.u32 %s2798, 4
          %s2809 = int_to_ptr.vmem [resolvable:$true] %s2808
          %2811 = dma.vmem_to_hbm [thread:$0]  %s2809, 128, %s2806, %s2795
        $region84: #{tpu_custom_call.1} parent=59 // pred_fallthru
          _
      $region60: #{tpu_custom_call.1} parent=5 // pred_fallthru
        _
      %p2812 = scmp.le.s32.totalorder 2, %s24
      // Predicated region
      $region85: #{tpu_custom_call.1} parent=5 // pred_check
        %p2813 = pneg %p2812
      $region86: #{tpu_custom_call.1} parent=5 // pred_check_branch
        %2815 = sbr.rel (%p2813) target = $region88
      $region87: #{tpu_custom_call.1} parent=5 // pred_region
        %s2816 = ssub.s32 %s24, 2
        // Predicated region
        $region89: #{tpu_custom_call.1} parent=87 // pred_check
          %p2817 = pneg %p268
        $region90: #{tpu_custom_call.1} parent=87 // pred_check_branch
          %2819 = sbr.rel (%p2817) target = $region92
        $region91: #{tpu_custom_call.1} parent=87 // pred_region
          %s2820 = sand.u32 %s253, 1
          %s2821 = scalar_lea.sflag [#allocation4], %s2820
          %s2822 = sand.u32 %s253, 1
          %s2823 = smul.addr %s2822, 8
          %s2824 = scalar_lea.vmem [#allocation11], %s2823
          %2825 = dma.done %s2821, 128
        $region92: #{tpu_custom_call.1} parent=87 // pred_fallthru
          _
      $region88: #{tpu_custom_call.1} parent=5 // pred_fallthru
        _
    $region6: #{tpu_custom_call.1} parent=1 // loop_footer
      %s28 = sadd.s32 1, %s24
    $region7: #{tpu_custom_call.1} parent=1 // loop_footer_branch
      %23 = sbr.rel target = $region3
    $region8: #{tpu_custom_call.1} parent=1 // loop_exit
      _
    %2826 = vsyncpa [#allocation3], 1
    %s2827 = scalar_lea.sflag [#allocation3], 1
    %2828 = vsyncpa %s2827, 1
    %2829 = vsyncpa [#allocation6], 1
    %2830 = vsyncpa [#allocation9], 1
    %2831 = vsyncpa [#allocation4], 1
    %s2832 = scalar_lea.sflag [#allocation4], 1
    %2833 = vsyncpa %s2832, 1

</llo_original>
